<compile_context>
chip_gen: v5e
topology: v5e:2x2
jax: 0.10.0
libtpu: 0.0.40
codegen_flags: <defaults>
</compile_context>

<pallas_src>
import functools

import jax
import jax.numpy as jnp
from jax import lax
from jax.experimental import pallas as pl
from jax.experimental.pallas import tpu as pltpu


def _hardswish(v):
    return v * jnp.clip(v + 3.0, 0.0, 6.0) * (1.0 / 6.0)


def _hardswish6(v):
    # 6 * hardswish(v); the missing 1/6 is folded into the next linear op's weights.
    return v * jnp.clip(v + 3.0, 0.0, 6.0)


def _hardsigmoid(v):
    return jnp.clip(v + 3.0, 0.0, 6.0) * (1.0 / 6.0)


def _use_roll_path(K, stride, pad):
    return stride == 1 and K % 2 == 1 and pad == K // 2


def _round_up(x, m):
    return (x + m - 1) // m * m


def _tpu_hw_info():
    """Returns (vmem_capacity_bytes, default_scoped_vmem_bytes, bf16_valu_ok)."""
    kind = ""
    try:
        kind = jax.devices()[0].device_kind.lower()
    except Exception:
        pass
    old_gen = any(v in kind for v in ("v2", "v3", "v4", "v5"))
    vmem_cap = None
    try:
        vmem_cap = int(pltpu.get_tpu_info().vmem_capacity_bytes)
    except Exception:
        vmem_cap = None
    if vmem_cap is None or vmem_cap <= 0:
        vmem_cap = (64 * 2**20) if ("v7" in kind or "7x" in kind) else (128 * 2**20)
    default_scoped = (16 * 2**20) if old_gen else (32 * 2**20)
    bf16_valu = bool(kind) and ("tpu" in kind) and not old_gen
    return vmem_cap, default_scoped, bf16_valu


def _pick_batch_block(N, nb_cap, hw_out):
    """Largest divisor of N <= nb_cap; prefer one making nb*H_out*W_out % 128 == 0."""
    nb_cap = max(1, min(N, int(nb_cap)))
    best, best_lane = 1, None
    for d in range(1, nb_cap + 1):
        if N % d == 0:
            best = d
            if (d * hw_out) % 128 == 0:
                best_lane = d
    if best_lane is not None and 2 * best_lane >= best:
        return best_lane
    return best


def _bottleneck_kernel(
    x_ref,            # (Nb, H, W, C_in)               f32
    w_exp_ref,        # (C_in, E)                      bf16
    exp_s_ref,        # (1, E)                         f32  folded BN scale
    exp_b_ref,        # (1, E)                         f32  folded BN bias
    w_dw_ref,         # (K, K, E)                      f32  (already * 1/6)
    dw_s_ref,         # (1, E)                         f32
    dw_b_ref,         # (1, E)                         f32
    w_se1_ref,        # (E, E//r)                      bf16 (already * 1/6)
    b_se1_ref,        # (1, E//r)                      f32
    w_se2_ref,        # (E//r, E)                      bf16
    b_se2_ref,        # (1, E)                         f32
    w_pw_ref,         # (E, C_out_pad)                 bf16 zero-padded columns
    pw_s_ref,         # (1, C_out_pad)                 f32  (already * 1/6)
    pw_b_ref,         # (1, C_out_pad)                 f32
    o_ref,            # (Nb, H_out*W_out, C_out_pad)   f32  lane-dense output
    pad_ref,          # scratch: (Nb, H+2p, W[+2p], E) f32
    *, K, stride, pad, acc_dtype,
):
    Nb, H, W, C_in = x_ref.shape
    E = w_exp_ref.shape[1]
    C_out_pad = w_pw_ref.shape[1]
    H_out = (H + 2 * pad - K) // stride + 1
    W_out = (W + 2 * pad - K) // stride + 1

    # --- 1) expansion 1x1 conv (bf16 MXU, f32 accumulate) + BN + 6*Hardswish ------
    x2d = x_ref[...].reshape(Nb * H * W, C_in)
    y = jnp.dot(x2d.astype(jnp.bfloat16), w_exp_ref[...],
                preferred_element_type=jnp.float32)
    # 1/6 of the hardswish is folded into w_dw (next linear op).
    y = _hardswish6(y * exp_s_ref[...] + exp_b_ref[...]).reshape(Nb, H, W, E)

    # --- 2) depthwise KxK conv (taps accumulated in acc_dtype) --------------------
    w_dw = w_dw_ref[...].astype(acc_dtype)                     # (K, K, E)
    acc = None

    if _use_roll_path(K, stride, pad):
        # H_out == H and W_out == W. Pad only along H; the dx taps are XLU rolls
        # along W (kept in f32 - known-good layout) plus an edge mask; the mul/add
        # accumulation runs in acc_dtype (bf16 on v6e/v7x, f32 on v5e).
        Hp = H + 2 * pad
        if pad > 0:
            halo = jnp.zeros((Nb, pad, W, E), jnp.float32)
            pad_ref[:, 0:pad, :, :] = halo
            pad_ref[:, pad + H:, :, :] = halo
        pad_ref[:, pad:pad + H, :, :] = y
        yp = pad_ref[...]                                      # (Nb, Hp, W, E) f32
        flat = yp.reshape(Nb * Hp, W, E)
        w_idx = lax.broadcasted_iota(jnp.int32, (1, W, E), 1)
        for dx in range(K):
            sx = dx - pad                                      # in [-pad, pad]
            if sx == 0:
                col = yp
            else:
                # rolled[..., w, :] = yp[..., (w + sx) mod W, :]
                rolled = pltpu.roll(flat, (-sx) % W, axis=1)
                valid = ((w_idx >= max(0, -sx)) &
                         (w_idx < W + min(0, -sx)))
                col = jnp.where(valid, rolled, 0.0).reshape(Nb, Hp, W, E)
            col = col.astype(acc_dtype)
            for dy in range(K):
                term = col[:, dy:dy + H_out] * w_dw[dy, dx]
                acc = term if acc is None else acc + term
    else:
        # stride>1 / even-K fallback: halo-only zeroing of the padded scratch.
        Wp = W + 2 * pad
        if pad > 0:
            pad_ref[:, 0:pad, :, :] = jnp.zeros((Nb, pad, Wp, E), jnp.float32)
            pad_ref[:, pad + H:, :, :] = jnp.zeros((Nb, pad, Wp, E), jnp.float32)
            pad_ref[:, pad:pad + H, 0:pad, :] = jnp.zeros((Nb, H, pad, E), jnp.float32)
            pad_ref[:, pad:pad + H, pad + W:, :] = jnp.zeros((Nb, H, pad, E), jnp.float32)
        pad_ref[:, pad:pad + H, pad:pad + W, :] = y
        yp = pad_ref[...].astype(acc_dtype)
        for dy in range(K):
            for dx in range(K):
                win = yp[:, dy:dy + stride * H_out:stride,
                         dx:dx + stride * W_out:stride]
                term = win * w_dw[dy, dx]
                acc = term if acc is None else acc + term

    # BN scale/bias + hardswish in f32 (1/6 folded into w_se1 and pw scale).
    u = acc.astype(jnp.float32) * dw_s_ref[...] + dw_b_ref[...]
    z6 = _hardswish6(u)                                        # (Nb, H_out, W_out, E)

    # --- 3) squeeze & excitation (f32 pooling, bf16 matmuls, f32 accumulate) ------
    inv_hw = 1.0 / float(H_out * W_out)
    pooled = jnp.sum(z6.reshape(Nb, H_out * W_out, E), axis=1) * inv_hw   # (Nb, E)
    s1 = jnp.dot(pooled.astype(jnp.bfloat16), w_se1_ref[...],
                 preferred_element_type=jnp.float32)
    s1 = jnp.maximum(s1 + b_se1_ref[...], 0.0)                            # ReLU
    s2 = jnp.dot(s1.astype(jnp.bfloat16), w_se2_ref[...],
                 preferred_element_type=jnp.float32)
    s2 = _hardsigmoid(s2 + b_se2_ref[...])                                # (Nb, E)
    zs = z6 * s2[:, None, None, :]

    # --- 4) pointwise 1x1 conv + BN, natural (M,K)x(K,N) MXU, lane-dense store ----
    z2d = zs.reshape(Nb * H_out * W_out, E).astype(jnp.bfloat16)
    out = jnp.dot(z2d, w_pw_ref[...], preferred_element_type=jnp.float32)
    out = out * pw_s_ref[...] + pw_b_ref[...]
    o_ref[...] = out.reshape(Nb, H_out * W_out, C_out_pad)


def linear_bottleneck_v3(x, p, *, kernel=3, stride=1, batch_block=None,
                         input_layout="NCHW", output_layout="NCHW",
                         depthwise_dtype=None):
    """MobileNetV3 LinearBottleneck forward pass (inference BN folded).

    x: (N, C_in, H, W) if input_layout == "NCHW", else (N, H, W, C_in).
    Returns (N, C_out, H_out, W_out) (NCHW) or NHWC if output_layout == "NHWC".
    """
    assert input_layout in ("NCHW", "NHWC") and output_layout in ("NCHW", "NHWC")
    if input_layout == "NCHW":
        # TODO(synk): keep inter-layer activations NHWC (or fold this transpose into
        # the producer) so this per-layer HBM read+write disappears.
        x = jnp.transpose(x, (0, 2, 3, 1))
    x = x.astype(jnp.float32)

    N, H, W, C_in = x.shape
    E = p["w_exp"].shape[1]
    Er = p["w_se1"].shape[1]
    C_out = p["w_pw"].shape[1]
    K = kernel
    pad = K // 2
    H_out = (H + 2 * pad - K) // stride + 1
    W_out = (W + 2 * pad - K) // stride + 1
    C_out_pad = _round_up(C_out, 128)

    vmem_cap, default_scoped, bf16_valu = _tpu_hw_info()
    if depthwise_dtype is None:
        acc_dtype = jnp.bfloat16 if bf16_valu else jnp.float32
    else:
        acc_dtype = depthwise_dtype
    acc_bytes = jnp.dtype(acc_dtype).itemsize

    # --- batch-block selection: per-step working set <= ~1/3 of usable VMEM -------
    usable = max(default_scoped, min(vmem_cap - 16 * 2**20, (vmem_cap * 7) // 8))
    per_image = ((H + 2 * pad) * (W + 2 * pad)
                 * (2 * 4 * C_in             # input block (double buffered)
                    + 4 * 4 * E              # pad_ref + y + rolled col + z
                    + acc_bytes * E          # depthwise accumulator
                    + 2 * 4 * C_out_pad))    # output block (double buffered)
    weight_bytes = 2 * (2 * (C_in * E + E * Er + Er * E + E * C_out_pad)
                        + 4 * (K * K * E + 6 * E + 2 * Er + 2 * C_out_pad))
    budget = max(2 * 2**20, (usable - weight_bytes) // 3)
    nb_cap = max(1, budget // max(1, per_image))
    if N > 1:
        nb_cap = min(nb_cap, max(1, N // 2))  # >=2 grid steps: pipelining + 2 TCs
    nb = batch_block if batch_block is not None else _pick_batch_block(
        N, nb_cap, H_out * W_out)
    assert N % nb == 0, "batch_block must divide the batch size"
    grid = (N // nb,)
    # TODO(synk): if even nb=1 exceeds the budget (large early-stage feature maps on
    # v7x's 64 MiB VMEM), add H-row tiling with a two-pass SE (pool, then apply).

    vmem_need = int(nb * per_image + weight_bytes)
    if vmem_need <= default_scoped:
        vmem_limit = None
    else:
        vmem_limit = int(min(usable, max(vmem_need * 3 // 2, vmem_need + 4 * 2**20)))

    # --- weight preprocessing: bf16 MXU copies, hardswish-1/6 folding, padding ----
    w_exp = p["w_exp"].astype(jnp.bfloat16)
    w_dw = (p["w_dw"] * (1.0 / 6.0)).astype(jnp.float32)       # absorbs expand hswish /6
    w_se1 = (p["w_se1"] * (1.0 / 6.0)).astype(jnp.bfloat16)    # absorbs dw hswish /6
    w_se2 = p["w_se2"].astype(jnp.bfloat16)
    w_pw = jnp.zeros((E, C_out_pad), jnp.bfloat16).at[:, :C_out].set(
        p["w_pw"].astype(jnp.bfloat16))
    pw_s = jnp.zeros((1, C_out_pad), jnp.float32).at[:, :C_out].set(
        p["pw_s"].reshape(1, C_out) * (1.0 / 6.0))             # absorbs dw hswish /6
    pw_b = jnp.zeros((1, C_out_pad), jnp.float32).at[:, :C_out].set(
        p["pw_b"].reshape(1, C_out))

    scratch_w = W if _use_roll_path(K, stride, pad) else W + 2 * pad
    scratch = pltpu.VMEM((nb, H + 2 * pad, scratch_w, E), jnp.float32)

    # Constant-index weight specs (fetched once across the grid by the pipeline).
    full = lambda shape: pl.BlockSpec(shape, lambda b: (0,) * len(shape))

    flops = (2 * N * H * W * C_in * E
             + 2 * N * H_out * W_out * K * K * E
             + 4 * N * E * Er
             + 2 * N * H_out * W_out * E * C_out_pad)
    bytes_accessed = (4 * (x.size + N * H_out * W_out * C_out_pad)
                      + 2 * (C_in * E + E * Er + Er * E + E * C_out_pad)
                      + 4 * (K * K * E + 6 * E + 2 * Er + 2 * C_out_pad))

    out = pl.pallas_call(
        functools.partial(_bottleneck_kernel, K=K, stride=stride, pad=pad,
                          acc_dtype=acc_dtype),
        out_shape=jax.ShapeDtypeStruct((N, H_out * W_out, C_out_pad), jnp.float32),
        grid_spec=pltpu.PrefetchScalarGridSpec(
            num_scalar_prefetch=0,
            grid=grid,
            in_specs=[
                pl.BlockSpec((nb, H, W, C_in), lambda b: (b, 0, 0, 0)),
                full((C_in, E)),
                full((1, E)), full((1, E)),
                full((K, K, E)),
                full((1, E)), full((1, E)),
                full((E, Er)), full((1, Er)),
                full((Er, E)), full((1, E)),
                full((E, C_out_pad)),
                full((1, C_out_pad)), full((1, C_out_pad)),
            ],
            out_specs=pl.BlockSpec((nb, H_out * W_out, C_out_pad),
                                   lambda b: (b, 0, 0)),
            scratch_shapes=[scratch],
        ),
        compiler_params=pltpu.CompilerParams(
            dimension_semantics=("parallel",),
            vmem_limit_bytes=vmem_limit,
        ),
        cost_estimate=pl.CostEstimate(
            flops=int(flops), transcendentals=0, bytes_accessed=int(bytes_accessed)),
    )(
        x,
        w_exp, p["exp_s"], p["exp_b"],
        w_dw, p["dw_s"], p["dw_b"],
        w_se1, p["b_se1"], w_se2, p["b_se2"],
        w_pw, pw_s, pw_b,
    )

    out = out.reshape(N, H_out, W_out, C_out_pad)[..., :C_out]
    if output_layout == "NCHW":
        out = jnp.transpose(out, (0, 3, 1, 2))
    return out


def _reference(x_nchw, p, *, kernel=3, stride=1):
    """Pure-JAX f32 reference of the same forward pass (for verification)."""
    x = jnp.transpose(x_nchw, (0, 2, 3, 1)).astype(jnp.float32)
    pad = kernel // 2
    E = p["w_exp"].shape[1]

    y = jnp.einsum("nhwc,ce->nhwe", x, p["w_exp"],
                   precision=lax.Precision.HIGHEST)
    y = _hardswish(y * p["exp_s"] + p["exp_b"])

    rhs = p["w_dw"].reshape(kernel, kernel, 1, E)                 # HWIO, groups=E
    z = lax.conv_general_dilated(
        y, rhs, window_strides=(stride, stride),
        padding=[(pad, pad), (pad, pad)],
        dimension_numbers=("NHWC", "HWIO", "NHWC"),
        feature_group_count=E, precision=lax.Precision.HIGHEST)
    z = _hardswish(z * p["dw_s"] + p["dw_b"])

    pooled = jnp.mean(z, axis=(1, 2), keepdims=True)              # (N,1,1,E)
    s1 = jnp.maximum(jnp.einsum("nhwe,er->nhwr", pooled, p["w_se1"],
                                precision=lax.Precision.HIGHEST) + p["b_se1"], 0.0)
    s2 = _hardsigmoid(jnp.einsum("nhwr,re->nhwe", s1, p["w_se2"],
                                 precision=lax.Precision.HIGHEST) + p["b_se2"])
    z = z * s2

    out = jnp.einsum("nhwe,eo->nhwo", z, p["w_pw"],
                     precision=lax.Precision.HIGHEST)
    out = out * p["pw_s"] + p["pw_b"]
    return jnp.transpose(out, (0, 3, 1, 2))


def make_params(key, c_in, expansion, c_out, kernel, reduction_ratio=4):
    """Deterministic synthetic parameters; BN folded with running_mean=0, running_var=1."""
    ks = jax.random.split(key, 14)
    nrm = lambda k, shape, s=0.1: s * jax.random.normal(k, shape, jnp.float32)
    eps = 1e-5
    e_r = expansion // reduction_ratio

    def bn(kg, kb, c):
        gamma = 1.0 + nrm(kg, (1, c))
        beta = nrm(kb, (1, c))
        return gamma / jnp.sqrt(1.0 + eps), beta                  # scale, bias

    exp_s, exp_b = bn(ks[1], ks[2], expansion)
    dw_s, dw_b = bn(ks[4], ks[5], expansion)
    pw_s, pw_b = bn(ks[11], ks[12], c_out)
    return {
        "w_exp": nrm(ks[0], (c_in, expansion)),
        "exp_s": exp_s, "exp_b": exp_b,
        "w_dw": nrm(ks[3], (kernel, kernel, expansion)),
        "dw_s": dw_s, "dw_b": dw_b,
        "w_se1": nrm(ks[6], (expansion, e_r)), "b_se1": nrm(ks[7], (1, e_r)),
        "w_se2": nrm(ks[8], (e_r, expansion)), "b_se2": nrm(ks[9], (1, expansion)),
        "w_pw": nrm(ks[10], (expansion, c_out)),
        "pw_s": pw_s, "pw_b": pw_b,
    }


if __name__ == "__main__":
    configs = [
        # (N, C_in, H, W, kernel, stride, expansion, C_out, reduction)
        (2, 8, 8, 8, 3, 1, 16, 8, 4),
        (2, 16, 16, 16, 3, 1, 64, 24, 4),
    ]
    key = jax.random.PRNGKey(0)
    for cfg in configs:
        N, C_IN, H, W, KERNEL, STRIDE, EXPANSION, C_OUT, RED = cfg
        kx, kp, key = jax.random.split(key, 3)
        x = jax.random.normal(kx, (N, C_IN, H, W), jnp.float32)
        params = make_params(kp, C_IN, EXPANSION, C_OUT, KERNEL, RED)

        out = jax.block_until_ready(
            linear_bottleneck_v3(x, params, kernel=KERNEL, stride=STRIDE))
        ref = jax.block_until_ready(
            _reference(x, params, kernel=KERNEL, stride=STRIDE))

        pad = KERNEL // 2
        H_OUT = (H + 2 * pad - KERNEL) // STRIDE + 1
        W_OUT = (W + 2 * pad - KERNEL) // STRIDE + 1
        assert out.shape == (N, C_OUT, H_OUT, W_OUT), out.shape
        max_err = float(jnp.max(jnp.abs(out - ref)))
        assert jnp.allclose(out, ref, rtol=2e-2, atol=2e-2), (cfg, max_err)

    print("KERNEL_OK")
</pallas_src>

<mosaic_0001>
module attributes {stable_mosaic.version = 11 : i64} {
  func.func @_bottleneck_kernel(%arg0: i32, %arg1: memref<1x8x8x8xf32, #tpu.memory_space<vmem>>, %arg2: memref<8x16xbf16, #tpu.memory_space<vmem>>, %arg3: memref<1x16xf32, #tpu.memory_space<vmem>>, %arg4: memref<1x16xf32, #tpu.memory_space<vmem>>, %arg5: memref<3x3x16xf32, #tpu.memory_space<vmem>>, %arg6: memref<1x16xf32, #tpu.memory_space<vmem>>, %arg7: memref<1x16xf32, #tpu.memory_space<vmem>>, %arg8: memref<16x4xbf16, #tpu.memory_space<vmem>>, %arg9: memref<1x4xf32, #tpu.memory_space<vmem>>, %arg10: memref<4x16xbf16, #tpu.memory_space<vmem>>, %arg11: memref<1x16xf32, #tpu.memory_space<vmem>>, %arg12: memref<16x128xbf16, #tpu.memory_space<vmem>>, %arg13: memref<1x128xf32, #tpu.memory_space<vmem>>, %arg14: memref<1x128xf32, #tpu.memory_space<vmem>>, %arg15: memref<1x64x128xf32, #tpu.memory_space<vmem>>, %arg16: memref<1x10x8x16xf32, #tpu.memory_space<vmem>>) attributes {dimension_semantics = [#tpu.dimension_semantics<parallel>], iteration_bounds = array<i64: 2>, scalar_prefetch = 0 : i64, scratch_operands = 1 : i64, tpu.core_type = #tpu.core_type<tc>, window_params = [{transform_indices = @transform_0, window_bounds = array<i64: 1, 8, 8, 8>}, {pipeline_mode = #tpu.pipeline_mode<synchronous>, transform_indices = @transform_1, window_bounds = array<i64: 8, 16>}, {pipeline_mode = #tpu.pipeline_mode<synchronous>, transform_indices = @transform_2, window_bounds = array<i64: 1, 16>}, {pipeline_mode = #tpu.pipeline_mode<synchronous>, transform_indices = @transform_3, window_bounds = array<i64: 1, 16>}, {pipeline_mode = #tpu.pipeline_mode<synchronous>, transform_indices = @transform_4, window_bounds = array<i64: 3, 3, 16>}, {pipeline_mode = #tpu.pipeline_mode<synchronous>, transform_indices = @transform_5, window_bounds = array<i64: 1, 16>}, {pipeline_mode = #tpu.pipeline_mode<synchronous>, transform_indices = @transform_6, window_bounds = array<i64: 1, 16>}, {pipeline_mode = #tpu.pipeline_mode<synchronous>, transform_indices = @transform_7, window_bounds = array<i64: 16, 4>}, {pipeline_mode = #tpu.pipeline_mode<synchronous>, transform_indices = @transform_8, window_bounds = array<i64: 1, 4>}, {pipeline_mode = #tpu.pipeline_mode<synchronous>, transform_indices = @transform_9, window_bounds = array<i64: 4, 16>}, {pipeline_mode = #tpu.pipeline_mode<synchronous>, transform_indices = @transform_10, window_bounds = array<i64: 1, 16>}, {pipeline_mode = #tpu.pipeline_mode<synchronous>, transform_indices = @transform_11, window_bounds = array<i64: 16, 128>}, {pipeline_mode = #tpu.pipeline_mode<synchronous>, transform_indices = @transform_12, window_bounds = array<i64: 1, 128>}, {pipeline_mode = #tpu.pipeline_mode<synchronous>, transform_indices = @transform_13, window_bounds = array<i64: 1, 128>}, {transform_indices = @transform_14, window_bounds = array<i64: 1, 64, 128>}]} {
    %c0 = arith.constant 0 : index
    %c0_0 = arith.constant 0 : index
    %c0_1 = arith.constant 0 : index
    %c0_2 = arith.constant 0 : index
    %0 = vector.load %arg1[%c0, %c0_0, %c0_1, %c0_2] : memref<1x8x8x8xf32, #tpu.memory_space<vmem>>, vector<1x8x8x8xf32>
    %1 = vector.shape_cast %0 : vector<1x8x8x8xf32> to vector<64x8xf32>
    %2 = arith.truncf %1 : vector<64x8xf32> to vector<64x8xbf16>
    %c0_3 = arith.constant 0 : index
    %c0_4 = arith.constant 0 : index
    %3 = vector.load %arg2[%c0_3, %c0_4] : memref<8x16xbf16, #tpu.memory_space<vmem>>, vector<8x16xbf16>
    %cst = arith.constant dense<0.000000e+00> : vector<64x16xf32>
    %4 = tpu.matmul %2, %3, %cst {dimension_numbers = #tpu.dot_dimension_numbers<[1], [0], [0], [1], [0, 0, 1, 1], [], []>} : vector<64x8xbf16>, vector<8x16xbf16>, vector<64x16xf32> -> vector<64x16xf32>
    %c0_5 = arith.constant 0 : index
    %c0_6 = arith.constant 0 : index
    %5 = vector.load %arg3[%c0_5, %c0_6] : memref<1x16xf32, #tpu.memory_space<vmem>>, vector<1x16xf32>
    %6 = vector.broadcast %5 : vector<1x16xf32> to vector<64x16xf32>
    %7 = arith.mulf %4, %6 : vector<64x16xf32>
    %c0_7 = arith.constant 0 : index
    %c0_8 = arith.constant 0 : index
    %8 = vector.load %arg4[%c0_7, %c0_8] : memref<1x16xf32, #tpu.memory_space<vmem>>, vector<1x16xf32>
    %9 = vector.broadcast %8 : vector<1x16xf32> to vector<64x16xf32>
    %10 = arith.addf %7, %9 : vector<64x16xf32>
    %cst_9 = arith.constant 3.000000e+00 : f32
    %11 = vector.broadcast %cst_9 : f32 to vector<64x16xf32>
    %12 = arith.addf %10, %11 : vector<64x16xf32>
    %cst_10 = arith.constant 0.000000e+00 : f32
    %cst_11 = arith.constant 6.000000e+00 : f32
    %13 = vector.broadcast %cst_10 : f32 to vector<64x16xf32>
    %14 = arith.maximumf %13, %12 : vector<64x16xf32>
    %15 = vector.broadcast %cst_11 : f32 to vector<64x16xf32>
    %16 = arith.minimumf %15, %14 : vector<64x16xf32>
    %17 = arith.mulf %10, %16 : vector<64x16xf32>
    %18 = vector.shape_cast %17 : vector<64x16xf32> to vector<1x8x8x16xf32>
    %c0_12 = arith.constant 0 : index
    %c0_13 = arith.constant 0 : index
    %c0_14 = arith.constant 0 : index
    %19 = vector.load %arg5[%c0_12, %c0_13, %c0_14] : memref<3x3x16xf32, #tpu.memory_space<vmem>>, vector<3x3x16xf32>
    %cst_15 = arith.constant 0.000000e+00 : f32
    %20 = vector.broadcast %cst_15 : f32 to vector<1x1x8x16xf32>
    %c0_16 = arith.constant 0 : index
    %c0_17 = arith.constant 0 : index
    %c0_18 = arith.constant 0 : index
    %c0_19 = arith.constant 0 : index
    %21 = vector.load %arg16[%c0_16, %c0_17, %c0_18, %c0_19] : memref<1x10x8x16xf32, #tpu.memory_space<vmem>>, vector<1x1x8x16xf32>
    tpu.vector_store %arg16[%c0_16, %c0_17, %c0_18, %c0_19], %20 {strides = array<i32>} : memref<1x10x8x16xf32, #tpu.memory_space<vmem>>, vector<1x1x8x16xf32>,
    %c0_20 = arith.constant 0 : index
    %c9 = arith.constant 9 : index
    %c0_21 = arith.constant 0 : index
    %c0_22 = arith.constant 0 : index
    %22 = vector.load %arg16[%c0_20, %c9, %c0_21, %c0_22] : memref<1x10x8x16xf32, #tpu.memory_space<vmem>>, vector<1x1x8x16xf32>
    tpu.vector_store %arg16[%c0_20, %c9, %c0_21, %c0_22], %20 {strides = array<i32>} : memref<1x10x8x16xf32, #tpu.memory_space<vmem>>, vector<1x1x8x16xf32>,
    %c0_23 = arith.constant 0 : index
    %c1 = arith.constant 1 : index
    %c0_24 = arith.constant 0 : index
    %c0_25 = arith.constant 0 : index
    %23 = vector.load %arg16[%c0_23, %c1, %c0_24, %c0_25] : memref<1x10x8x16xf32, #tpu.memory_space<vmem>>, vector<1x8x8x16xf32>
    tpu.vector_store %arg16[%c0_23, %c1, %c0_24, %c0_25], %18 {strides = array<i32>} : memref<1x10x8x16xf32, #tpu.memory_space<vmem>>, vector<1x8x8x16xf32>,
    %c0_26 = arith.constant 0 : index
    %c0_27 = arith.constant 0 : index
    %c0_28 = arith.constant 0 : index
    %c0_29 = arith.constant 0 : index
    %24 = vector.load %arg16[%c0_26, %c0_27, %c0_28, %c0_29] : memref<1x10x8x16xf32, #tpu.memory_space<vmem>>, vector<1x10x8x16xf32>
    %25 = vector.shape_cast %24 : vector<1x10x8x16xf32> to vector<10x8x16xf32>
    %26 = tpu.iota {dimensions = array<i32: 1>} : vector<1x8x16xi32>
    %c1_i32 = arith.constant 1 : i32
    %27 = tpu.dynamic_rotate %25 by %c1_i32 dim 1 : vector<10x8x16xf32>, i32 -> vector<10x8x16xf32>
    %c1_i32_30 = arith.constant 1 : i32
    %28 = vector.broadcast %c1_i32_30 : i32 to vector<1x8x16xi32>
    %29 = arith.cmpi sge, %26, %28 : vector<1x8x16xi32>
    %c8_i32 = arith.constant 8 : i32
    %30 = vector.broadcast %c8_i32 : i32 to vector<1x8x16xi32>
    %31 = arith.cmpi slt, %26, %30 : vector<1x8x16xi32>
    %32 = arith.andi %29, %31 : vector<1x8x16xi1>
    %cst_31 = arith.constant 0.000000e+00 : f32
    %33 = vector.shape_cast %32 : vector<1x8x16xi1> to vector<1x8x16xi1>
    %34 = vector.broadcast %33 : vector<1x8x16xi1> to vector<10x8x16xi1>
    %35 = vector.broadcast %cst_31 : f32 to vector<10x8x16xf32>
    %36 = arith.select %34, %27, %35 : vector<10x8x16xi1>, vector<10x8x16xf32>
    %37 = vector.shape_cast %36 : vector<10x8x16xf32> to vector<1x10x8x16xf32>
    %38 = vector.extract_strided_slice %37 {offsets = [0, 0, 0, 0], sizes = [1, 8, 8, 16], strides = [1, 1, 1, 1]} : vector<1x10x8x16xf32> to vector<1x8x8x16xf32>
    %39 = vector.extract_strided_slice %19 {offsets = [0, 0, 0], sizes = [1, 1, 16], strides = [1, 1, 1]} : vector<3x3x16xf32> to vector<1x1x16xf32>
    %40 = vector.shape_cast %39 : vector<1x1x16xf32> to vector<16xf32>
    %41 = vector.shape_cast %40 : vector<16xf32> to vector<1x1x1x16xf32>
    %42 = vector.broadcast %41 : vector<1x1x1x16xf32> to vector<1x8x8x16xf32>
    %43 = arith.mulf %38, %42 : vector<1x8x8x16xf32>
    %44 = vector.extract_strided_slice %37 {offsets = [0, 1, 0, 0], sizes = [1, 8, 8, 16], strides = [1, 1, 1, 1]} : vector<1x10x8x16xf32> to vector<1x8x8x16xf32>
    %45 = vector.extract_strided_slice %19 {offsets = [1, 0, 0], sizes = [1, 1, 16], strides = [1, 1, 1]} : vector<3x3x16xf32> to vector<1x1x16xf32>
    %46 = vector.shape_cast %45 : vector<1x1x16xf32> to vector<16xf32>
    %47 = vector.shape_cast %46 : vector<16xf32> to vector<1x1x1x16xf32>
    %48 = vector.broadcast %47 : vector<1x1x1x16xf32> to vector<1x8x8x16xf32>
    %49 = arith.mulf %44, %48 : vector<1x8x8x16xf32>
    %50 = arith.addf %43, %49 : vector<1x8x8x16xf32>
    %51 = vector.extract_strided_slice %37 {offsets = [0, 2, 0, 0], sizes = [1, 8, 8, 16], strides = [1, 1, 1, 1]} : vector<1x10x8x16xf32> to vector<1x8x8x16xf32>
    %52 = vector.extract_strided_slice %19 {offsets = [2, 0, 0], sizes = [1, 1, 16], strides = [1, 1, 1]} : vector<3x3x16xf32> to vector<1x1x16xf32>
    %53 = vector.shape_cast %52 : vector<1x1x16xf32> to vector<16xf32>
    %54 = vector.shape_cast %53 : vector<16xf32> to vector<1x1x1x16xf32>
    %55 = vector.broadcast %54 : vector<1x1x1x16xf32> to vector<1x8x8x16xf32>
    %56 = arith.mulf %51, %55 : vector<1x8x8x16xf32>
    %57 = arith.addf %50, %56 : vector<1x8x8x16xf32>
    %58 = vector.extract_strided_slice %24 {offsets = [0, 0, 0, 0], sizes = [1, 8, 8, 16], strides = [1, 1, 1, 1]} : vector<1x10x8x16xf32> to vector<1x8x8x16xf32>
    %59 = vector.extract_strided_slice %19 {offsets = [0, 1, 0], sizes = [1, 1, 16], strides = [1, 1, 1]} : vector<3x3x16xf32> to vector<1x1x16xf32>
    %60 = vector.shape_cast %59 : vector<1x1x16xf32> to vector<16xf32>
    %61 = vector.shape_cast %60 : vector<16xf32> to vector<1x1x1x16xf32>
    %62 = vector.broadcast %61 : vector<1x1x1x16xf32> to vector<1x8x8x16xf32>
    %63 = arith.mulf %58, %62 : vector<1x8x8x16xf32>
    %64 = arith.addf %57, %63 : vector<1x8x8x16xf32>
    %65 = vector.extract_strided_slice %24 {offsets = [0, 1, 0, 0], sizes = [1, 8, 8, 16], strides = [1, 1, 1, 1]} : vector<1x10x8x16xf32> to vector<1x8x8x16xf32>
    %66 = vector.extract_strided_slice %19 {offsets = [1, 1, 0], sizes = [1, 1, 16], strides = [1, 1, 1]} : vector<3x3x16xf32> to vector<1x1x16xf32>
    %67 = vector.shape_cast %66 : vector<1x1x16xf32> to vector<16xf32>
    %68 = vector.shape_cast %67 : vector<16xf32> to vector<1x1x1x16xf32>
    %69 = vector.broadcast %68 : vector<1x1x1x16xf32> to vector<1x8x8x16xf32>
    %70 = arith.mulf %65, %69 : vector<1x8x8x16xf32>
    %71 = arith.addf %64, %70 : vector<1x8x8x16xf32>
    %72 = vector.extract_strided_slice %24 {offsets = [0, 2, 0, 0], sizes = [1, 8, 8, 16], strides = [1, 1, 1, 1]} : vector<1x10x8x16xf32> to vector<1x8x8x16xf32>
    %73 = vector.extract_strided_slice %19 {offsets = [2, 1, 0], sizes = [1, 1, 16], strides = [1, 1, 1]} : vector<3x3x16xf32> to vector<1x1x16xf32>
    %74 = vector.shape_cast %73 : vector<1x1x16xf32> to vector<16xf32>
    %75 = vector.shape_cast %74 : vector<16xf32> to vector<1x1x1x16xf32>
    %76 = vector.broadcast %75 : vector<1x1x1x16xf32> to vector<1x8x8x16xf32>
    %77 = arith.mulf %72, %76 : vector<1x8x8x16xf32>
    %78 = arith.addf %71, %77 : vector<1x8x8x16xf32>
    %c7_i32 = arith.constant 7 : i32
    %79 = tpu.dynamic_rotate %25 by %c7_i32 dim 1 : vector<10x8x16xf32>, i32 -> vector<10x8x16xf32>
    %c0_i32 = arith.constant 0 : i32
    %80 = vector.broadcast %c0_i32 : i32 to vector<1x8x16xi32>
    %81 = arith.cmpi sge, %26, %80 : vector<1x8x16xi32>
    %c7_i32_32 = arith.constant 7 : i32
    %82 = vector.broadcast %c7_i32_32 : i32 to vector<1x8x16xi32>
    %83 = arith.cmpi slt, %26, %82 : vector<1x8x16xi32>
    %84 = arith.andi %81, %83 : vector<1x8x16xi1>
    %cst_33 = arith.constant 0.000000e+00 : f32
    %85 = vector.shape_cast %84 : vector<1x8x16xi1> to vector<1x8x16xi1>
    %86 = vector.broadcast %85 : vector<1x8x16xi1> to vector<10x8x16xi1>
    %87 = vector.broadcast %cst_33 : f32 to vector<10x8x16xf32>
    %88 = arith.select %86, %79, %87 : vector<10x8x16xi1>, vector<10x8x16xf32>
    %89 = vector.shape_cast %88 : vector<10x8x16xf32> to vector<1x10x8x16xf32>
    %90 = vector.extract_strided_slice %89 {offsets = [0, 0, 0, 0], sizes = [1, 8, 8, 16], strides = [1, 1, 1, 1]} : vector<1x10x8x16xf32> to vector<1x8x8x16xf32>
    %91 = vector.extract_strided_slice %19 {offsets = [0, 2, 0], sizes = [1, 1, 16], strides = [1, 1, 1]} : vector<3x3x16xf32> to vector<1x1x16xf32>
    %92 = vector.shape_cast %91 : vector<1x1x16xf32> to vector<16xf32>
    %93 = vector.shape_cast %92 : vector<16xf32> to vector<1x1x1x16xf32>
    %94 = vector.broadcast %93 : vector<1x1x1x16xf32> to vector<1x8x8x16xf32>
    %95 = arith.mulf %90, %94 : vector<1x8x8x16xf32>
    %96 = arith.addf %78, %95 : vector<1x8x8x16xf32>
    %97 = vector.extract_strided_slice %89 {offsets = [0, 1, 0, 0], sizes = [1, 8, 8, 16], strides = [1, 1, 1, 1]} : vector<1x10x8x16xf32> to vector<1x8x8x16xf32>
    %98 = vector.extract_strided_slice %19 {offsets = [1, 2, 0], sizes = [1, 1, 16], strides = [1, 1, 1]} : vector<3x3x16xf32> to vector<1x1x16xf32>
    %99 = vector.shape_cast %98 : vector<1x1x16xf32> to vector<16xf32>
    %100 = vector.shape_cast %99 : vector<16xf32> to vector<1x1x1x16xf32>
    %101 = vector.broadcast %100 : vector<1x1x1x16xf32> to vector<1x8x8x16xf32>
    %102 = arith.mulf %97, %101 : vector<1x8x8x16xf32>
    %103 = arith.addf %96, %102 : vector<1x8x8x16xf32>
    %104 = vector.extract_strided_slice %89 {offsets = [0, 2, 0, 0], sizes = [1, 8, 8, 16], strides = [1, 1, 1, 1]} : vector<1x10x8x16xf32> to vector<1x8x8x16xf32>
    %105 = vector.extract_strided_slice %19 {offsets = [2, 2, 0], sizes = [1, 1, 16], strides = [1, 1, 1]} : vector<3x3x16xf32> to vector<1x1x16xf32>
    %106 = vector.shape_cast %105 : vector<1x1x16xf32> to vector<16xf32>
    %107 = vector.shape_cast %106 : vector<16xf32> to vector<1x1x1x16xf32>
    %108 = vector.broadcast %107 : vector<1x1x1x16xf32> to vector<1x8x8x16xf32>
    %109 = arith.mulf %104, %108 : vector<1x8x8x16xf32>
    %110 = arith.addf %103, %109 : vector<1x8x8x16xf32>
    %c0_34 = arith.constant 0 : index
    %c0_35 = arith.constant 0 : index
    %111 = vector.load %arg6[%c0_34, %c0_35] : memref<1x16xf32, #tpu.memory_space<vmem>>, vector<1x16xf32>
    %112 = vector.shape_cast %111 : vector<1x16xf32> to vector<1x1x1x16xf32>
    %113 = vector.broadcast %112 : vector<1x1x1x16xf32> to vector<1x8x8x16xf32>
    %114 = arith.mulf %110, %113 : vector<1x8x8x16xf32>
    %c0_36 = arith.constant 0 : index
    %c0_37 = arith.constant 0 : index
    %115 = vector.load %arg7[%c0_36, %c0_37] : memref<1x16xf32, #tpu.memory_space<vmem>>, vector<1x16xf32>
    %116 = vector.shape_cast %115 : vector<1x16xf32> to vector<1x1x1x16xf32>
    %117 = vector.broadcast %116 : vector<1x1x1x16xf32> to vector<1x8x8x16xf32>
    %118 = arith.addf %114, %117 : vector<1x8x8x16xf32>
    %cst_38 = arith.constant 3.000000e+00 : f32
    %119 = vector.broadcast %cst_38 : f32 to vector<1x8x8x16xf32>
    %120 = arith.addf %118, %119 : vector<1x8x8x16xf32>
    %cst_39 = arith.constant 0.000000e+00 : f32
    %cst_40 = arith.constant 6.000000e+00 : f32
    %121 = vector.broadcast %cst_39 : f32 to vector<1x8x8x16xf32>
    %122 = arith.maximumf %121, %120 : vector<1x8x8x16xf32>
    %123 = vector.broadcast %cst_40 : f32 to vector<1x8x8x16xf32>
    %124 = arith.minimumf %123, %122 : vector<1x8x8x16xf32>
    %125 = arith.mulf %118, %124 : vector<1x8x8x16xf32>
    %126 = vector.shape_cast %125 : vector<1x8x8x16xf32> to vector<1x64x16xf32>
    %cst_41 = arith.constant dense<0.000000e+00> : vector<1x16xf32>
    %127 = vector.multi_reduction <add>, %126, %cst_41 [1] : vector<1x64x16xf32> to vector<1x16xf32>
    %cst_42 = arith.constant 1.562500e-02 : f32
    %128 = vector.broadcast %cst_42 : f32 to vector<1x16xf32>
    %129 = arith.mulf %127, %128 : vector<1x16xf32>
    %130 = arith.truncf %129 : vector<1x16xf32> to vector<1x16xbf16>
    %c0_43 = arith.constant 0 : index
    %c0_44 = arith.constant 0 : index
    %131 = vector.load %arg8[%c0_43, %c0_44] : memref<16x4xbf16, #tpu.memory_space<vmem>>, vector<16x4xbf16>
    %cst_45 = arith.constant dense<0.000000e+00> : vector<1x4xf32>
    %132 = tpu.matmul %130, %131, %cst_45 {dimension_numbers = #tpu.dot_dimension_numbers<[1], [0], [0], [1], [0, 0, 1, 1], [], []>} : vector<1x16xbf16>, vector<16x4xbf16>, vector<1x4xf32> -> vector<1x4xf32>
    %c0_46 = arith.constant 0 : index
    %c0_47 = arith.constant 0 : index
    %133 = vector.load %arg9[%c0_46, %c0_47] : memref<1x4xf32, #tpu.memory_space<vmem>>, vector<1x4xf32>
    %134 = arith.addf %132, %133 : vector<1x4xf32>
    %cst_48 = arith.constant 0.000000e+00 : f32
    %135 = vector.broadcast %cst_48 : f32 to vector<1x4xf32>
    %136 = arith.maximumf %134, %135 : vector<1x4xf32>
    %137 = arith.truncf %136 : vector<1x4xf32> to vector<1x4xbf16>
    %c0_49 = arith.constant 0 : index
    %c0_50 = arith.constant 0 : index
    %138 = vector.load %arg10[%c0_49, %c0_50] : memref<4x16xbf16, #tpu.memory_space<vmem>>, vector<4x16xbf16>
    %cst_51 = arith.constant dense<0.000000e+00> : vector<1x16xf32>
    %139 = tpu.matmul %137, %138, %cst_51 {dimension_numbers = #tpu.dot_dimension_numbers<[1], [0], [0], [1], [0, 0, 1, 1], [], []>} : vector<1x4xbf16>, vector<4x16xbf16>, vector<1x16xf32> -> vector<1x16xf32>
    %c0_52 = arith.constant 0 : index
    %c0_53 = arith.constant 0 : index
    %140 = vector.load %arg11[%c0_52, %c0_53] : memref<1x16xf32, #tpu.memory_space<vmem>>, vector<1x16xf32>
    %141 = arith.addf %139, %140 : vector<1x16xf32>
    %cst_54 = arith.constant 3.000000e+00 : f32
    %142 = vector.broadcast %cst_54 : f32 to vector<1x16xf32>
    %143 = arith.addf %141, %142 : vector<1x16xf32>
    %cst_55 = arith.constant 0.000000e+00 : f32
    %cst_56 = arith.constant 6.000000e+00 : f32
    %144 = vector.broadcast %cst_55 : f32 to vector<1x16xf32>
    %145 = arith.maximumf %144, %143 : vector<1x16xf32>
    %146 = vector.broadcast %cst_56 : f32 to vector<1x16xf32>
    %147 = arith.minimumf %146, %145 : vector<1x16xf32>
    %cst_57 = arith.constant 0.166666672 : f32
    %148 = vector.broadcast %cst_57 : f32 to vector<1x16xf32>
    %149 = arith.mulf %147, %148 : vector<1x16xf32>
    %150 = vector.shape_cast %149 : vector<1x16xf32> to vector<1x1x1x16xf32>
    %151 = vector.broadcast %150 : vector<1x1x1x16xf32> to vector<1x8x8x16xf32>
    %152 = arith.mulf %125, %151 : vector<1x8x8x16xf32>
    %153 = vector.shape_cast %152 : vector<1x8x8x16xf32> to vector<64x16xf32>
    %154 = arith.truncf %153 : vector<64x16xf32> to vector<64x16xbf16>
    %c0_58 = arith.constant 0 : index
    %c0_59 = arith.constant 0 : index
    %155 = vector.load %arg12[%c0_58, %c0_59] : memref<16x128xbf16, #tpu.memory_space<vmem>>, vector<16x128xbf16>
    %cst_60 = arith.constant dense<0.000000e+00> : vector<64x128xf32>
    %156 = tpu.matmul %154, %155, %cst_60 {dimension_numbers = #tpu.dot_dimension_numbers<[1], [0], [0], [1], [0, 0, 1, 1], [], []>} : vector<64x16xbf16>, vector<16x128xbf16>, vector<64x128xf32> -> vector<64x128xf32>
    %c0_61 = arith.constant 0 : index
    %c0_62 = arith.constant 0 : index
    %157 = vector.load %arg13[%c0_61, %c0_62] : memref<1x128xf32, #tpu.memory_space<vmem>>, vector<1x128xf32>
    %158 = vector.broadcast %157 : vector<1x128xf32> to vector<64x128xf32>
    %159 = arith.mulf %156, %158 : vector<64x128xf32>
    %c0_63 = arith.constant 0 : index
    %c0_64 = arith.constant 0 : index
    %160 = vector.load %arg14[%c0_63, %c0_64] : memref<1x128xf32, #tpu.memory_space<vmem>>, vector<1x128xf32>
    %161 = vector.broadcast %160 : vector<1x128xf32> to vector<64x128xf32>
    %162 = arith.addf %159, %161 : vector<64x128xf32>
    %163 = vector.shape_cast %162 : vector<64x128xf32> to vector<1x64x128xf32>
    %c0_65 = arith.constant 0 : index
    %c0_66 = arith.constant 0 : index
    %c0_67 = arith.constant 0 : index
    %164 = vector.load %arg15[%c0_65, %c0_66, %c0_67] : memref<1x64x128xf32, #tpu.memory_space<vmem>>, vector<1x64x128xf32>
    tpu.vector_store %arg15[%c0_65, %c0_66, %c0_67], %163 {strides = array<i32>} : memref<1x64x128xf32, #tpu.memory_space<vmem>>, vector<1x64x128xf32>,
    return
  }
  func.func @transform_0(%arg0: i32) -> (i32, i32, i32, i32) {
    %c0_i32 = arith.constant 0 : i32
    %c0_i32_0 = arith.constant 0 : i32
    %c0_i32_1 = arith.constant 0 : i32
    %c0_i32_2 = arith.constant 0 : i32
    return %arg0, %c0_i32, %c0_i32_0, %c0_i32_1 : i32, i32, i32, i32
  }
  func.func @transform_1(%arg0: i32) -> (i32, i32) {
    %c0_i32 = arith.constant 0 : i32
    %c0_i32_0 = arith.constant 0 : i32
    %c0_i32_1 = arith.constant 0 : i32
    return %c0_i32, %c0_i32_0 : i32, i32
  }
  func.func @transform_2(%arg0: i32) -> (i32, i32) {
    %c0_i32 = arith.constant 0 : i32
    %c0_i32_0 = arith.constant 0 : i32
    %c0_i32_1 = arith.constant 0 : i32
    return %c0_i32, %c0_i32_0 : i32, i32
  }
  func.func @transform_3(%arg0: i32) -> (i32, i32) {
    %c0_i32 = arith.constant 0 : i32
    %c0_i32_0 = arith.constant 0 : i32
    %c0_i32_1 = arith.constant 0 : i32
    return %c0_i32, %c0_i32_0 : i32, i32
  }
  func.func @transform_4(%arg0: i32) -> (i32, i32, i32) {
    %c0_i32 = arith.constant 0 : i32
    %c0_i32_0 = arith.constant 0 : i32
    %c0_i32_1 = arith.constant 0 : i32
    %c0_i32_2 = arith.constant 0 : i32
    return %c0_i32, %c0_i32_0, %c0_i32_1 : i32, i32, i32
  }
  func.func @transform_5(%arg0: i32) -> (i32, i32) {
    %c0_i32 = arith.constant 0 : i32
    %c0_i32_0 = arith.constant 0 : i32
    %c0_i32_1 = arith.constant 0 : i32
    return %c0_i32, %c0_i32_0 : i32, i32
  }
  func.func @transform_6(%arg0: i32) -> (i32, i32) {
    %c0_i32 = arith.constant 0 : i32
    %c0_i32_0 = arith.constant 0 : i32
    %c0_i32_1 = arith.constant 0 : i32
    return %c0_i32, %c0_i32_0 : i32, i32
  }
  func.func @transform_7(%arg0: i32) -> (i32, i32) {
    %c0_i32 = arith.constant 0 : i32
    %c0_i32_0 = arith.constant 0 : i32
    %c0_i32_1 = arith.constant 0 : i32
    return %c0_i32, %c0_i32_0 : i32, i32
  }
  func.func @transform_8(%arg0: i32) -> (i32, i32) {
    %c0_i32 = arith.constant 0 : i32
    %c0_i32_0 = arith.constant 0 : i32
    %c0_i32_1 = arith.constant 0 : i32
    return %c0_i32, %c0_i32_0 : i32, i32
  }
  func.func @transform_9(%arg0: i32) -> (i32, i32) {
    %c0_i32 = arith.constant 0 : i32
    %c0_i32_0 = arith.constant 0 : i32
    %c0_i32_1 = arith.constant 0 : i32
    return %c0_i32, %c0_i32_0 : i32, i32
  }
  func.func @transform_10(%arg0: i32) -> (i32, i32) {
    %c0_i32 = arith.constant 0 : i32
    %c0_i32_0 = arith.constant 0 : i32
    %c0_i32_1 = arith.constant 0 : i32
    return %c0_i32, %c0_i32_0 : i32, i32
  }
  func.func @transform_11(%arg0: i32) -> (i32, i32) {
    %c0_i32 = arith.constant 0 : i32
    %c0_i32_0 = arith.constant 0 : i32
    %c0_i32_1 = arith.constant 0 : i32
    return %c0_i32, %c0_i32_0 : i32, i32
  }
  func.func @transform_12(%arg0: i32) -> (i32, i32) {
    %c0_i32 = arith.constant 0 : i32
    %c0_i32_0 = arith.constant 0 : i32
    %c0_i32_1 = arith.constant 0 : i32
    return %c0_i32, %c0_i32_0 : i32, i32
  }
  func.func @transform_13(%arg0: i32) -> (i32, i32) {
    %c0_i32 = arith.constant 0 : i32
    %c0_i32_0 = arith.constant 0 : i32
    %c0_i32_1 = arith.constant 0 : i32
    return %c0_i32, %c0_i32_0 : i32, i32
  }
  func.func @transform_14(%arg0: i32) -> (i32, i32, i32) {
    %c0_i32 = arith.constant 0 : i32
    %c0_i32_0 = arith.constant 0 : i32
    %c0_i32_1 = arith.constant 0 : i32
    return %arg0, %c0_i32, %c0_i32_0 : i32, i32, i32
  }
}

</mosaic_0001>

<llo_original>
// kernel: tpu_custom_call.1
$region0: #{tpu_custom_call.1}
  #allocation0 [shape = 'u32[]', space=smem, size = 0x4, offset = 0x4, fixed_abs, tag = 'smem constant byte address 0x4 - core index']
  #allocation1 [shape = 'u32[72,128]{1,0:T(1,128)}', space=vmem, size = 0x9000, scoped, tag = 'internal scratch']
  #allocation2 [shape = 'f32[1,10,8,16]{3,2,1,0:T(8,128)}', space=vmem, size = 0xa000, scoped, tag = 'scratch operand']
  %s0 = inlined_call_operand.hbm [shape: f32[2,8,8,8], index: 0, kind: input, shape index: {}]
  %s1 = inlined_call_operand.hbm [shape: bf16[8,16], index: 1, kind: input, shape index: {}]
  %s2 = inlined_call_operand.hbm [shape: f32[1,16], index: 2, kind: input, shape index: {}]
  %s3 = inlined_call_operand.hbm [shape: f32[1,16], index: 3, kind: input, shape index: {}]
  %s4 = inlined_call_operand.vmem [shape: f32[3,3,16], index: 4, kind: input, shape index: {}]
  %s5 = inlined_call_operand.hbm [shape: f32[1,16], index: 5, kind: input, shape index: {}]
  %s6 = inlined_call_operand.hbm [shape: f32[1,16], index: 6, kind: input, shape index: {}]
  %s7 = inlined_call_operand.vmem [shape: bf16[16,4], index: 7, kind: input, shape index: {}]
  %s8 = inlined_call_operand.hbm [shape: f32[1,4], index: 8, kind: input, shape index: {}]
  %s9 = inlined_call_operand.hbm [shape: bf16[4,16], index: 9, kind: input, shape index: {}]
  %s10 = inlined_call_operand.hbm [shape: f32[1,16], index: 10, kind: input, shape index: {}]
  %s11 = inlined_call_operand.vmem [shape: bf16[16,128], index: 11, kind: input, shape index: {}]
  %s12 = inlined_call_operand.vmem [shape: f32[1,128], index: 12, kind: input, shape index: {}]
  %s13 = inlined_call_operand.vmem [shape: f32[1,128], index: 13, kind: input, shape index: {}]
  %s14 = inlined_call_operand.hbm [shape: f32[2,64,128], index: 14, kind: output, shape index: {}]
  %s15 = sld [smem:[#allocation0]]
  $region125: #{tpu_custom_call.1} parent=0
    _
  %s17 = ssub.s32 1, %s15
  %s18 = scalar_select 0, %s17, %s15
  $region1: #{tpu_custom_call.1} parent=0
    #allocation3 [shape = 'u8[65536]{0}', space=vmem, size = 0x10000, scoped, tag = 'input window, operand 0']
    #allocation4 [shape = 's32[2]{0}', space=sflag, size = 0x8, scoped, tag = 'scoped memory for tpu_custom_call.1']
    #allocation5 [shape = 's32[2]{0}', space=sflag, size = 0x8, scoped, tag = 'scoped memory for tpu_custom_call.1']
    #allocation6 [shape = 'u8[2048]{0}', space=vmem, size = 0x800, scoped, tag = 'input window, operand 1, single buffered']
    #allocation7 [shape = 's32[1]{0}', space=sflag, size = 0x4, scoped, tag = 'scoped memory for tpu_custom_call.1']
    #allocation8 [shape = 'u8[512]{0}', space=vmem, size = 0x400, scoped, tag = 'input window, operand 2, single buffered']
    #allocation9 [shape = 'u8[512]{0}', space=vmem, size = 0x400, scoped, tag = 'input window, operand 3, single buffered']
    #allocation10 [shape = 's32[1]{0}', space=sflag, size = 0x4, scoped, tag = 'scoped memory for tpu_custom_call.1']
    #allocation11 [shape = 'u8[512]{0}', space=vmem, size = 0x400, scoped, tag = 'input window, operand 5, single buffered']
    #allocation12 [shape = 'u8[512]{0}', space=vmem, size = 0x400, scoped, tag = 'input window, operand 6, single buffered']
    #allocation13 [shape = 's32[1]{0}', space=sflag, size = 0x4, scoped, tag = 'scoped memory for tpu_custom_call.1']
    #allocation14 [shape = 'u8[512]{0}', space=vmem, size = 0x400, scoped, tag = 'input window, operand 8, single buffered']
    #allocation15 [shape = 'u8[1024]{0}', space=vmem, size = 0x400, scoped, tag = 'input window, operand 9, single buffered']
    #allocation16 [shape = 's32[1]{0}', space=sflag, size = 0x4, scoped, tag = 'scoped memory for tpu_custom_call.1']
    #allocation17 [shape = 'u8[512]{0}', space=vmem, size = 0x400, scoped, tag = 'input window, operand 10, single buffered']
    #allocation18 [shape = 'u8[65536]{0}', space=vmem, size = 0x10000, scoped, tag = 'output window, operand 0']
    %19 = vsyncpa [#allocation4], 0
    %s20 = scalar_lea.sflag [#allocation4], 1
    %21 = vsyncpa %s20, 0
    %22 = vsyncpa [#allocation7], 0
    %23 = vsyncpa [#allocation10], 0
    %24 = vsyncpa [#allocation13], 0
    %25 = vsyncpa [#allocation16], 0
    %26 = vsyncpa [#allocation5], 0
    %s27 = scalar_lea.sflag [#allocation5], 1
    %28 = vsyncpa %s27, 0
    loop: start=0, step=1, limit=4
    $region2: #{tpu_custom_call.1} parent=1 // loop_pre_header
      _
    $region3: #{tpu_custom_call.1} parent=1 // loop_header
      %s30 = sphi 0, %s34
      %p31 = scmp.ge.s32.totalorder %s30, 4
      %s40 = sphi 0, %s42
      %s43 = sphi 0, %s40
      %s44 = sphi 0, %s43
      %s60 = sphi 0, %s44
      %s64 = sphi 0, %s64
      %s66 = sphi 0, %s64
      %s67 = sphi 0, %s66
      %s81 = sphi 0, %s67
      %s85 = sphi 0, %s85
      %s87 = sphi 0, %s85
      %s88 = sphi 0, %s87
      %s102 = sphi 0, %s88
      %s106 = sphi 0, %s106
      %s108 = sphi 0, %s106
      %s109 = sphi 0, %s108
      %s123 = sphi 0, %s109
      %s127 = sphi 0, %s127
      %s129 = sphi 0, %s127
      %s130 = sphi 0, %s129
      %s144 = sphi 0, %s130
      %s148 = sphi 0, %s148
      %s150 = sphi 0, %s148
      %s151 = sphi 0, %s150
      %s165 = sphi 0, %s151
      %s169 = sphi 0, %s169
      %s171 = sphi 0, %s169
      %s172 = sphi 0, %s171
      %s186 = sphi 0, %s172
      %s190 = sphi 0, %s190
      %s192 = sphi 0, %s190
      %s193 = sphi 0, %s192
      %s207 = sphi 0, %s193
      %s211 = sphi 0, %s211
      %s213 = sphi 0, %s211
      %s214 = sphi 0, %s213
      %s228 = sphi 0, %s214
      %s232 = sphi 0, %s232
      %s234 = sphi 0, %s232
      %s235 = sphi 0, %s234
      %s249 = sphi 0, %s235
      %s253 = sphi 0, %s253
      %s255 = sphi 0, %s253
      %s256 = sphi 0, %s255
      %s270 = sphi 0, %s256
      %s274 = sphi 0, %s274
      %s276 = sphi 0, %s274
      %s277 = sphi 0, %s276
      %s291 = sphi 0, %s277
      %s295 = sphi 0, %s295
      %s297 = sphi 0, %s295
      %s298 = sphi 0, %s297
      %s312 = sphi 0, %s298
      %s316 = sphi 0, %s316
      %s318 = sphi 0, %s316
      %s319 = sphi 0, %s318
      %s333 = sphi 0, %s319
      %s339 = sphi 0, %s341
      %s342 = sphi 0, %s339
      %s343 = sphi 0, %s342
      %s359 = sphi 0, %s343
    $region4: #{tpu_custom_call.1} parent=1 // loop_header_branch
      %33 = sbr.rel (%p31) target = $region8
    $region5: #{tpu_custom_call.1} parent=1 // loop_body
      %s35 = ssub.s32 %s30, 1
      %s36 = ssub.s32 %s30, 2
      %s37 = sadd.s32 %s30, 1
      %s38 = ssub.s32 %s30, %s37
      %p39 = scmp.eq.s32.totalorder %s38, 0
      %s41 = sadd.s32 %s40, 1
      %s42 = scalar_select %p39, %s40, %s41
      %p45 = pneg %p39
      %p46 = scmp.eq.s32.totalorder %s30, 1
      %p47 = por %p45, %p46
      %p48 = scmp.ne.s32.totalorder %s40, %s43
      %p49 = scmp.eq.s32.totalorder %s30, 0
      %p50 = por %p48, %p49
      %p51 = scmp.ne.s32.totalorder %s40, %s43
      %p52 = scmp.eq.s32.totalorder %s35, 1
      %p53 = por %p51, %p52
      %p54 = scmp.ne.s32.totalorder %s43, %s44
      %p55 = scmp.eq.s32.totalorder %s35, 0
      %p56 = por %p54, %p55
      %p57 = scmp.ne.s32.totalorder %s43, %s44
      %p58 = scmp.eq.s32.totalorder %s36, 1
      %p59 = por %p57, %p58
      %p61 = scmp.ne.s32.totalorder %s44, %s60
      %p62 = scmp.eq.s32.totalorder %s36, 0
      %p63 = por %p61, %p62
      %s65 = sadd.s32 %s64, 1
      %p68 = scmp.eq.s32.totalorder %s30, 1
      %p69 = scmp.ne.s32.totalorder %s64, %s66
      %p70 = scmp.eq.s32.totalorder %s30, 0
      %p71 = por %p69, %p70
      %p72 = scmp.ne.s32.totalorder %s64, %s66
      %p73 = scmp.eq.s32.totalorder %s35, 1
      %p74 = por %p72, %p73
      %p75 = scmp.ne.s32.totalorder %s66, %s67
      %p76 = scmp.eq.s32.totalorder %s35, 0
      %p77 = por %p75, %p76
      %p78 = scmp.ne.s32.totalorder %s66, %s67
      %p79 = scmp.eq.s32.totalorder %s36, 1
      %p80 = por %p78, %p79
      %p82 = scmp.ne.s32.totalorder %s67, %s81
      %p83 = scmp.eq.s32.totalorder %s36, 0
      %p84 = por %p82, %p83
      %s86 = sadd.s32 %s85, 1
      %p89 = scmp.eq.s32.totalorder %s30, 1
      %p90 = scmp.ne.s32.totalorder %s85, %s87
      %p91 = scmp.eq.s32.totalorder %s30, 0
      %p92 = por %p90, %p91
      %p93 = scmp.ne.s32.totalorder %s85, %s87
      %p94 = scmp.eq.s32.totalorder %s35, 1
      %p95 = por %p93, %p94
      %p96 = scmp.ne.s32.totalorder %s87, %s88
      %p97 = scmp.eq.s32.totalorder %s35, 0
      %p98 = por %p96, %p97
      %p99 = scmp.ne.s32.totalorder %s87, %s88
      %p100 = scmp.eq.s32.totalorder %s36, 1
      %p101 = por %p99, %p100
      %p103 = scmp.ne.s32.totalorder %s88, %s102
      %p104 = scmp.eq.s32.totalorder %s36, 0
      %p105 = por %p103, %p104
      %s107 = sadd.s32 %s106, 1
      %p110 = scmp.eq.s32.totalorder %s30, 1
      %p111 = scmp.ne.s32.totalorder %s106, %s108
      %p112 = scmp.eq.s32.totalorder %s30, 0
      %p113 = por %p111, %p112
      %p114 = scmp.ne.s32.totalorder %s106, %s108
      %p115 = scmp.eq.s32.totalorder %s35, 1
      %p116 = por %p114, %p115
      %p117 = scmp.ne.s32.totalorder %s108, %s109
      %p118 = scmp.eq.s32.totalorder %s35, 0
      %p119 = por %p117, %p118
      %p120 = scmp.ne.s32.totalorder %s108, %s109
      %p121 = scmp.eq.s32.totalorder %s36, 1
      %p122 = por %p120, %p121
      %p124 = scmp.ne.s32.totalorder %s109, %s123
      %p125 = scmp.eq.s32.totalorder %s36, 0
      %p126 = por %p124, %p125
      %s128 = sadd.s32 %s127, 1
      %p131 = scmp.eq.s32.totalorder %s30, 1
      %p132 = scmp.ne.s32.totalorder %s127, %s129
      %p133 = scmp.eq.s32.totalorder %s30, 0
      %p134 = por %p132, %p133
      %p135 = scmp.ne.s32.totalorder %s127, %s129
      %p136 = scmp.eq.s32.totalorder %s35, 1
      %p137 = por %p135, %p136
      %p138 = scmp.ne.s32.totalorder %s129, %s130
      %p139 = scmp.eq.s32.totalorder %s35, 0
      %p140 = por %p138, %p139
      %p141 = scmp.ne.s32.totalorder %s129, %s130
      %p142 = scmp.eq.s32.totalorder %s36, 1
      %p143 = por %p141, %p142
      %p145 = scmp.ne.s32.totalorder %s130, %s144
      %p146 = scmp.eq.s32.totalorder %s36, 0
      %p147 = por %p145, %p146
      %s149 = sadd.s32 %s148, 1
      %p152 = scmp.eq.s32.totalorder %s30, 1
      %p153 = scmp.ne.s32.totalorder %s148, %s150
      %p154 = scmp.eq.s32.totalorder %s30, 0
      %p155 = por %p153, %p154
      %p156 = scmp.ne.s32.totalorder %s148, %s150
      %p157 = scmp.eq.s32.totalorder %s35, 1
      %p158 = por %p156, %p157
      %p159 = scmp.ne.s32.totalorder %s150, %s151
      %p160 = scmp.eq.s32.totalorder %s35, 0
      %p161 = por %p159, %p160
      %p162 = scmp.ne.s32.totalorder %s150, %s151
      %p163 = scmp.eq.s32.totalorder %s36, 1
      %p164 = por %p162, %p163
      %p166 = scmp.ne.s32.totalorder %s151, %s165
      %p167 = scmp.eq.s32.totalorder %s36, 0
      %p168 = por %p166, %p167
      %s170 = sadd.s32 %s169, 1
      %p173 = scmp.eq.s32.totalorder %s30, 1
      %p174 = scmp.ne.s32.totalorder %s169, %s171
      %p175 = scmp.eq.s32.totalorder %s30, 0
      %p176 = por %p174, %p175
      %p177 = scmp.ne.s32.totalorder %s169, %s171
      %p178 = scmp.eq.s32.totalorder %s35, 1
      %p179 = por %p177, %p178
      %p180 = scmp.ne.s32.totalorder %s171, %s172
      %p181 = scmp.eq.s32.totalorder %s35, 0
      %p182 = por %p180, %p181
      %p183 = scmp.ne.s32.totalorder %s171, %s172
      %p184 = scmp.eq.s32.totalorder %s36, 1
      %p185 = por %p183, %p184
      %p187 = scmp.ne.s32.totalorder %s172, %s186
      %p188 = scmp.eq.s32.totalorder %s36, 0
      %p189 = por %p187, %p188
      %s191 = sadd.s32 %s190, 1
      %p194 = scmp.eq.s32.totalorder %s30, 1
      %p195 = scmp.ne.s32.totalorder %s190, %s192
      %p196 = scmp.eq.s32.totalorder %s30, 0
      %p197 = por %p195, %p196
      %p198 = scmp.ne.s32.totalorder %s190, %s192
      %p199 = scmp.eq.s32.totalorder %s35, 1
      %p200 = por %p198, %p199
      %p201 = scmp.ne.s32.totalorder %s192, %s193
      %p202 = scmp.eq.s32.totalorder %s35, 0
      %p203 = por %p201, %p202
      %p204 = scmp.ne.s32.totalorder %s192, %s193
      %p205 = scmp.eq.s32.totalorder %s36, 1
      %p206 = por %p204, %p205
      %p208 = scmp.ne.s32.totalorder %s193, %s207
      %p209 = scmp.eq.s32.totalorder %s36, 0
      %p210 = por %p208, %p209
      %s212 = sadd.s32 %s211, 1
      %p215 = scmp.eq.s32.totalorder %s30, 1
      %p216 = scmp.ne.s32.totalorder %s211, %s213
      %p217 = scmp.eq.s32.totalorder %s30, 0
      %p218 = por %p216, %p217
      %p219 = scmp.ne.s32.totalorder %s211, %s213
      %p220 = scmp.eq.s32.totalorder %s35, 1
      %p221 = por %p219, %p220
      %p222 = scmp.ne.s32.totalorder %s213, %s214
      %p223 = scmp.eq.s32.totalorder %s35, 0
      %p224 = por %p222, %p223
      %p225 = scmp.ne.s32.totalorder %s213, %s214
      %p226 = scmp.eq.s32.totalorder %s36, 1
      %p227 = por %p225, %p226
      %p229 = scmp.ne.s32.totalorder %s214, %s228
      %p230 = scmp.eq.s32.totalorder %s36, 0
      %p231 = por %p229, %p230
      %s233 = sadd.s32 %s232, 1
      %p236 = scmp.eq.s32.totalorder %s30, 1
      %p237 = scmp.ne.s32.totalorder %s232, %s234
      %p238 = scmp.eq.s32.totalorder %s30, 0
      %p239 = por %p237, %p238
      %p240 = scmp.ne.s32.totalorder %s232, %s234
      %p241 = scmp.eq.s32.totalorder %s35, 1
      %p242 = por %p240, %p241
      %p243 = scmp.ne.s32.totalorder %s234, %s235
      %p244 = scmp.eq.s32.totalorder %s35, 0
      %p245 = por %p243, %p244
      %p246 = scmp.ne.s32.totalorder %s234, %s235
      %p247 = scmp.eq.s32.totalorder %s36, 1
      %p248 = por %p246, %p247
      %p250 = scmp.ne.s32.totalorder %s235, %s249
      %p251 = scmp.eq.s32.totalorder %s36, 0
      %p252 = por %p250, %p251
      %s254 = sadd.s32 %s253, 1
      %p257 = scmp.eq.s32.totalorder %s30, 1
      %p258 = scmp.ne.s32.totalorder %s253, %s255
      %p259 = scmp.eq.s32.totalorder %s30, 0
      %p260 = por %p258, %p259
      %p261 = scmp.ne.s32.totalorder %s253, %s255
      %p262 = scmp.eq.s32.totalorder %s35, 1
      %p263 = por %p261, %p262
      %p264 = scmp.ne.s32.totalorder %s255, %s256
      %p265 = scmp.eq.s32.totalorder %s35, 0
      %p266 = por %p264, %p265
      %p267 = scmp.ne.s32.totalorder %s255, %s256
      %p268 = scmp.eq.s32.totalorder %s36, 1
      %p269 = por %p267, %p268
      %p271 = scmp.ne.s32.totalorder %s256, %s270
      %p272 = scmp.eq.s32.totalorder %s36, 0
      %p273 = por %p271, %p272
      %s275 = sadd.s32 %s274, 1
      %p278 = scmp.eq.s32.totalorder %s30, 1
      %p279 = scmp.ne.s32.totalorder %s274, %s276
      %p280 = scmp.eq.s32.totalorder %s30, 0
      %p281 = por %p279, %p280
      %p282 = scmp.ne.s32.totalorder %s274, %s276
      %p283 = scmp.eq.s32.totalorder %s35, 1
      %p284 = por %p282, %p283
      %p285 = scmp.ne.s32.totalorder %s276, %s277
      %p286 = scmp.eq.s32.totalorder %s35, 0
      %p287 = por %p285, %p286
      %p288 = scmp.ne.s32.totalorder %s276, %s277
      %p289 = scmp.eq.s32.totalorder %s36, 1
      %p290 = por %p288, %p289
      %p292 = scmp.ne.s32.totalorder %s277, %s291
      %p293 = scmp.eq.s32.totalorder %s36, 0
      %p294 = por %p292, %p293
      %s296 = sadd.s32 %s295, 1
      %p299 = scmp.eq.s32.totalorder %s30, 1
      %p300 = scmp.ne.s32.totalorder %s295, %s297
      %p301 = scmp.eq.s32.totalorder %s30, 0
      %p302 = por %p300, %p301
      %p303 = scmp.ne.s32.totalorder %s295, %s297
      %p304 = scmp.eq.s32.totalorder %s35, 1
      %p305 = por %p303, %p304
      %p306 = scmp.ne.s32.totalorder %s297, %s298
      %p307 = scmp.eq.s32.totalorder %s35, 0
      %p308 = por %p306, %p307
      %p309 = scmp.ne.s32.totalorder %s297, %s298
      %p310 = scmp.eq.s32.totalorder %s36, 1
      %p311 = por %p309, %p310
      %p313 = scmp.ne.s32.totalorder %s298, %s312
      %p314 = scmp.eq.s32.totalorder %s36, 0
      %p315 = por %p313, %p314
      %s317 = sadd.s32 %s316, 1
      %p320 = scmp.eq.s32.totalorder %s30, 1
      %p321 = scmp.ne.s32.totalorder %s316, %s318
      %p322 = scmp.eq.s32.totalorder %s30, 0
      %p323 = por %p321, %p322
      %p324 = scmp.ne.s32.totalorder %s316, %s318
      %p325 = scmp.eq.s32.totalorder %s35, 1
      %p326 = por %p324, %p325
      %p327 = scmp.ne.s32.totalorder %s318, %s319
      %p328 = scmp.eq.s32.totalorder %s35, 0
      %p329 = por %p327, %p328
      %p330 = scmp.ne.s32.totalorder %s318, %s319
      %p331 = scmp.eq.s32.totalorder %s36, 1
      %p332 = por %p330, %p331
      %p334 = scmp.ne.s32.totalorder %s319, %s333
      %p335 = scmp.eq.s32.totalorder %s36, 0
      %p336 = por %p334, %p335
      %s337 = ssub.s32 %s30, %s37
      %p338 = scmp.eq.s32.totalorder %s337, 0
      %s340 = sadd.s32 %s339, 1
      %s341 = scalar_select %p338, %s339, %s340
      %p344 = pneg %p338
      %p345 = scmp.eq.s32.totalorder %s30, 1
      %p346 = por %p344, %p345
      %p347 = scmp.ne.s32.totalorder %s339, %s342
      %p348 = scmp.eq.s32.totalorder %s30, 0
      %p349 = por %p347, %p348
      %p350 = scmp.ne.s32.totalorder %s339, %s342
      %p351 = scmp.eq.s32.totalorder %s35, 1
      %p352 = por %p350, %p351
      %p353 = scmp.ne.s32.totalorder %s342, %s343
      %p354 = scmp.eq.s32.totalorder %s35, 0
      %p355 = por %p353, %p354
      %p356 = scmp.ne.s32.totalorder %s342, %s343
      %p357 = scmp.eq.s32.totalorder %s36, 1
      %p358 = por %p356, %p357
      %p360 = scmp.ne.s32.totalorder %s343, %s359
      %p361 = scmp.eq.s32.totalorder %s36, 0
      %p362 = por %p360, %p361
      %p363 = scmp.le.s32.totalorder 1, %s30
      %p364 = scmp.lt.s32.totalorder %s30, 3
      %p365 = pnand %p363, %p364
      %p366 = pneg %p365
      // Predicated region
      $region9: #{tpu_custom_call.1} parent=5 // pred_check
        _
      $region10: #{tpu_custom_call.1} parent=5 // pred_check_branch
        %368 = sbr.rel (%p365) target = $region12
      $region11: #{tpu_custom_call.1} parent=5 // pred_region
        %s369 = ssub.s32 %s30, 1
        // Predicated region
        $region13: #{tpu_custom_call.1} parent=11 // pred_check
          %p370 = pneg %p77
        $region14: #{tpu_custom_call.1} parent=11 // pred_check_branch
          %372 = sbr.rel (%p370) target = $region16
        $region15: #{tpu_custom_call.1} parent=11 // pred_region
          %374 = vsyncadd [#allocation7], 0
          %s376 = sshll.u32 %s1, 4
          %s377 = int_to_ptr.hbm [resolvable:$true] %s376
          %s378 = sshll.u32 [#allocation6], 4
          %s379 = int_to_ptr.vmem [resolvable:$true] %s378
          %381 = dma.hbm_to_vmem [thread:$0]  %s377, 64, %s379, [#allocation7]
        $region16: #{tpu_custom_call.1} parent=11 // pred_fallthru
          _
        // Predicated region
        $region17: #{tpu_custom_call.1} parent=11 // pred_check
          %p382 = pneg %p98
        $region18: #{tpu_custom_call.1} parent=11 // pred_check_branch
          %384 = sbr.rel (%p382) target = $region20
        $region19: #{tpu_custom_call.1} parent=11 // pred_region
          %386 = vsyncadd [#allocation7], 0
          %s388 = sshll.u32 %s2, 4
          %s389 = int_to_ptr.hbm [resolvable:$true] %s388
          %s390 = sshll.u32 [#allocation8], 4
          %s391 = int_to_ptr.vmem [resolvable:$true] %s390
          %393 = dma.hbm_to_vmem [thread:$0]  %s389, 16, %s391, [#allocation7]
        $region20: #{tpu_custom_call.1} parent=11 // pred_fallthru
          _
        // Predicated region
        $region21: #{tpu_custom_call.1} parent=11 // pred_check
          %p394 = pneg %p119
        $region22: #{tpu_custom_call.1} parent=11 // pred_check_branch
          %396 = sbr.rel (%p394) target = $region24
        $region23: #{tpu_custom_call.1} parent=11 // pred_region
          %398 = vsyncadd [#allocation10], 0
          %s400 = sshll.u32 %s3, 4
          %s401 = int_to_ptr.hbm [resolvable:$true] %s400
          %s402 = sshll.u32 [#allocation9], 4
          %s403 = int_to_ptr.vmem [resolvable:$true] %s402
          %405 = dma.hbm_to_vmem [thread:$0]  %s401, 16, %s403, [#allocation10]
        $region24: #{tpu_custom_call.1} parent=11 // pred_fallthru
          _
        // Predicated region
        $region25: #{tpu_custom_call.1} parent=11 // pred_check
          %p406 = pneg %p140
        $region26: #{tpu_custom_call.1} parent=11 // pred_check_branch
          %408 = sbr.rel (%p406) target = $region28
        $region27: #{tpu_custom_call.1} parent=11 // pred_region
          _
        $region28: #{tpu_custom_call.1} parent=11 // pred_fallthru
          _
        // Predicated region
        $region29: #{tpu_custom_call.1} parent=11 // pred_check
          %p409 = pneg %p161
        $region30: #{tpu_custom_call.1} parent=11 // pred_check_branch
          %411 = sbr.rel (%p409) target = $region32
        $region31: #{tpu_custom_call.1} parent=11 // pred_region
          %413 = vsyncadd [#allocation10], 0
          %s415 = sshll.u32 %s5, 4
          %s416 = int_to_ptr.hbm [resolvable:$true] %s415
          %s417 = sshll.u32 [#allocation11], 4
          %s418 = int_to_ptr.vmem [resolvable:$true] %s417
          %420 = dma.hbm_to_vmem [thread:$0]  %s416, 16, %s418, [#allocation10]
        $region32: #{tpu_custom_call.1} parent=11 // pred_fallthru
          _
        // Predicated region
        $region33: #{tpu_custom_call.1} parent=11 // pred_check
          %p421 = pneg %p182
        $region34: #{tpu_custom_call.1} parent=11 // pred_check_branch
          %423 = sbr.rel (%p421) target = $region36
        $region35: #{tpu_custom_call.1} parent=11 // pred_region
          %425 = vsyncadd [#allocation13], 0
          %s427 = sshll.u32 %s6, 4
          %s428 = int_to_ptr.hbm [resolvable:$true] %s427
          %s429 = sshll.u32 [#allocation12], 4
          %s430 = int_to_ptr.vmem [resolvable:$true] %s429
          %432 = dma.hbm_to_vmem [thread:$0]  %s428, 16, %s430, [#allocation13]
        $region36: #{tpu_custom_call.1} parent=11 // pred_fallthru
          _
        // Predicated region
        $region37: #{tpu_custom_call.1} parent=11 // pred_check
          %p433 = pneg %p203
        $region38: #{tpu_custom_call.1} parent=11 // pred_check_branch
          %435 = sbr.rel (%p433) target = $region40
        $region39: #{tpu_custom_call.1} parent=11 // pred_region
          _
        $region40: #{tpu_custom_call.1} parent=11 // pred_fallthru
          _
        // Predicated region
        $region41: #{tpu_custom_call.1} parent=11 // pred_check
          %p436 = pneg %p224
        $region42: #{tpu_custom_call.1} parent=11 // pred_check_branch
          %438 = sbr.rel (%p436) target = $region44
        $region43: #{tpu_custom_call.1} parent=11 // pred_region
          %440 = vsyncadd [#allocation13], 0
          %s442 = sshll.u32 %s8, 4
          %s443 = int_to_ptr.hbm [resolvable:$true] %s442
          %s444 = sshll.u32 [#allocation14], 4
          %s445 = int_to_ptr.vmem [resolvable:$true] %s444
          %447 = dma.hbm_to_vmem [thread:$0]  %s443, 16, %s445, [#allocation13]
        $region44: #{tpu_custom_call.1} parent=11 // pred_fallthru
          _
        // Predicated region
        $region45: #{tpu_custom_call.1} parent=11 // pred_check
          %p448 = pneg %p245
        $region46: #{tpu_custom_call.1} parent=11 // pred_check_branch
          %450 = sbr.rel (%p448) target = $region48
        $region47: #{tpu_custom_call.1} parent=11 // pred_region
          %452 = vsyncadd [#allocation16], 0
          %s454 = sshll.u32 %s9, 4
          %s455 = int_to_ptr.hbm [resolvable:$true] %s454
          %s456 = sshll.u32 [#allocation15], 4
          %s457 = int_to_ptr.vmem [resolvable:$true] %s456
          %459 = dma.hbm_to_vmem [thread:$0]  %s455, 32, %s457, [#allocation16]
        $region48: #{tpu_custom_call.1} parent=11 // pred_fallthru
          _
        // Predicated region
        $region49: #{tpu_custom_call.1} parent=11 // pred_check
          %p460 = pneg %p266
        $region50: #{tpu_custom_call.1} parent=11 // pred_check_branch
          %462 = sbr.rel (%p460) target = $region52
        $region51: #{tpu_custom_call.1} parent=11 // pred_region
          %464 = vsyncadd [#allocation16], 0
          %s466 = sshll.u32 %s10, 4
          %s467 = int_to_ptr.hbm [resolvable:$true] %s466
          %s468 = sshll.u32 [#allocation17], 4
          %s469 = int_to_ptr.vmem [resolvable:$true] %s468
          %471 = dma.hbm_to_vmem [thread:$0]  %s467, 16, %s469, [#allocation16]
        $region52: #{tpu_custom_call.1} parent=11 // pred_fallthru
          _
        // Predicated region
        $region53: #{tpu_custom_call.1} parent=11 // pred_check
          %p472 = pneg %p287
        $region54: #{tpu_custom_call.1} parent=11 // pred_check_branch
          %474 = sbr.rel (%p472) target = $region56
        $region55: #{tpu_custom_call.1} parent=11 // pred_region
          _
        $region56: #{tpu_custom_call.1} parent=11 // pred_fallthru
          _
        // Predicated region
        $region57: #{tpu_custom_call.1} parent=11 // pred_check
          %p475 = pneg %p308
        $region58: #{tpu_custom_call.1} parent=11 // pred_check_branch
          %477 = sbr.rel (%p475) target = $region60
        $region59: #{tpu_custom_call.1} parent=11 // pred_region
          _
        $region60: #{tpu_custom_call.1} parent=11 // pred_fallthru
          _
        // Predicated region
        $region61: #{tpu_custom_call.1} parent=11 // pred_check
          %p478 = pneg %p329
        $region62: #{tpu_custom_call.1} parent=11 // pred_check_branch
          %480 = sbr.rel (%p478) target = $region64
        $region63: #{tpu_custom_call.1} parent=11 // pred_region
          _
        $region64: #{tpu_custom_call.1} parent=11 // pred_fallthru
          _
      $region12: #{tpu_custom_call.1} parent=5 // pred_fallthru
        _
      %p481 = scmp.lt.s32.totalorder %s30, 2
      // Predicated region
      $region65: #{tpu_custom_call.1} parent=5 // pred_check
        %p482 = pneg %p481
      $region66: #{tpu_custom_call.1} parent=5 // pred_check_branch
        %484 = sbr.rel (%p482) target = $region68
      $region67: #{tpu_custom_call.1} parent=5 // pred_region
        // Predicated region
        $region69: #{tpu_custom_call.1} parent=67 // pred_check
          %p485 = pneg %p50
        $region70: #{tpu_custom_call.1} parent=67 // pred_check_branch
          %487 = sbr.rel (%p485) target = $region72
        $region71: #{tpu_custom_call.1} parent=67 // pred_region
          %s488 = sand.u32 %s40, 1
          %s489 = scalar_lea.sflag [#allocation4], %s488
          %s490 = sand.u32 %s40, 1
          %s491 = smul.addr %s490, 64
          %s492 = scalar_lea.vmem [#allocation3], %s491
          %494 = vsyncadd %s489, 0
          %s495 = smul.addr %s30, 8
          %s496 = smul.addr %s495, 8
          %s497 = scalar_lea.hbm %s0, %s496
          %s498 = sshll.u32 %s497, 4
          %s499 = int_to_ptr.hbm [resolvable:$true] %s498
          %s500 = sshll.u32 %s492, 4
          %s501 = int_to_ptr.vmem [resolvable:$true] %s500
          %506 = dma.hbm_to_vmem [thread:$0]  %s499, 1024, %s501, %s489, 128, 128, 8
        $region72: #{tpu_custom_call.1} parent=67 // pred_fallthru
          _
      $region68: #{tpu_custom_call.1} parent=5 // pred_fallthru
        _
      %p507 = scmp.le.s32.totalorder 1, %s30
      %p508 = scmp.lt.s32.totalorder %s30, 3
      %p509 = pnand %p507, %p508
      %p510 = pneg %p509
      // Predicated region
      $region73: #{tpu_custom_call.1} parent=5 // pred_check
        _
      $region74: #{tpu_custom_call.1} parent=5 // pred_check_branch
        %512 = sbr.rel (%p509) target = $region76
      $region75: #{tpu_custom_call.1} parent=5 // pred_region
        %s513 = ssub.s32 %s30, 1
        %s514 = sand.u32 %s43, 1
        %s515 = scalar_lea.sflag [#allocation4], %s514
        %s516 = sand.u32 %s43, 1
        %s517 = smul.addr %s516, 64
        %s518 = scalar_lea.vmem [#allocation3], %s517
        // Predicated region
        $region77: #{tpu_custom_call.1} parent=75 // pred_check
          %p519 = pneg %p56
        $region78: #{tpu_custom_call.1} parent=75 // pred_check_branch
          %521 = sbr.rel (%p519) target = $region80
        $region79: #{tpu_custom_call.1} parent=75 // pred_region
          %523 = dma.done %s515, 1024
        $region80: #{tpu_custom_call.1} parent=75 // pred_fallthru
          _
        // Predicated region
        $region81: #{tpu_custom_call.1} parent=75 // pred_check
          %p524 = pneg %p77
        $region82: #{tpu_custom_call.1} parent=75 // pred_check_branch
          %526 = sbr.rel (%p524) target = $region84
        $region83: #{tpu_custom_call.1} parent=75 // pred_region
          %528 = dma.done [#allocation7], 64
        $region84: #{tpu_custom_call.1} parent=75 // pred_fallthru
          _
        // Predicated region
        $region85: #{tpu_custom_call.1} parent=75 // pred_check
          %p529 = pneg %p98
        $region86: #{tpu_custom_call.1} parent=75 // pred_check_branch
          %531 = sbr.rel (%p529) target = $region88
        $region87: #{tpu_custom_call.1} parent=75 // pred_region
          %533 = dma.done [#allocation7], 16
        $region88: #{tpu_custom_call.1} parent=75 // pred_fallthru
          _
        // Predicated region
        $region89: #{tpu_custom_call.1} parent=75 // pred_check
          %p534 = pneg %p119
        $region90: #{tpu_custom_call.1} parent=75 // pred_check_branch
          %536 = sbr.rel (%p534) target = $region92
        $region91: #{tpu_custom_call.1} parent=75 // pred_region
          %538 = dma.done [#allocation10], 16
        $region92: #{tpu_custom_call.1} parent=75 // pred_fallthru
          _
        // Predicated region
        $region93: #{tpu_custom_call.1} parent=75 // pred_check
          %p539 = pneg %p161
        $region94: #{tpu_custom_call.1} parent=75 // pred_check_branch
          %541 = sbr.rel (%p539) target = $region96
        $region95: #{tpu_custom_call.1} parent=75 // pred_region
          %543 = dma.done [#allocation10], 16
        $region96: #{tpu_custom_call.1} parent=75 // pred_fallthru
          _
        // Predicated region
        $region97: #{tpu_custom_call.1} parent=75 // pred_check
          %p544 = pneg %p182
        $region98: #{tpu_custom_call.1} parent=75 // pred_check_branch
          %546 = sbr.rel (%p544) target = $region100
        $region99: #{tpu_custom_call.1} parent=75 // pred_region
          %548 = dma.done [#allocation13], 16
        $region100: #{tpu_custom_call.1} parent=75 // pred_fallthru
          _
        // Predicated region
        $region101: #{tpu_custom_call.1} parent=75 // pred_check
          %p549 = pneg %p224
        $region102: #{tpu_custom_call.1} parent=75 // pred_check_branch
          %551 = sbr.rel (%p549) target = $region104
        $region103: #{tpu_custom_call.1} parent=75 // pred_region
          %553 = dma.done [#allocation13], 16
        $region104: #{tpu_custom_call.1} parent=75 // pred_fallthru
          _
        // Predicated region
        $region105: #{tpu_custom_call.1} parent=75 // pred_check
          %p554 = pneg %p245
        $region106: #{tpu_custom_call.1} parent=75 // pred_check_branch
          %556 = sbr.rel (%p554) target = $region108
        $region107: #{tpu_custom_call.1} parent=75 // pred_region
          %558 = dma.done [#allocation16], 32
        $region108: #{tpu_custom_call.1} parent=75 // pred_fallthru
          _
        // Predicated region
        $region109: #{tpu_custom_call.1} parent=75 // pred_check
          %p559 = pneg %p266
        $region110: #{tpu_custom_call.1} parent=75 // pred_check_branch
          %561 = sbr.rel (%p559) target = $region112
        $region111: #{tpu_custom_call.1} parent=75 // pred_region
          %563 = dma.done [#allocation16], 16
        $region112: #{tpu_custom_call.1} parent=75 // pred_fallthru
          _
        %s564 = sand.u32 %s43, 1
        %s565 = scalar_lea.sflag [#allocation4], %s564
        %s566 = sand.u32 %s43, 1
        %s567 = smul.addr %s566, 64
        %s568 = scalar_lea.vmem [#allocation3], %s567
        %p569 = pneg %p56
        %p570 = pneg %p53
        %p571 = pneg %p77
        %p572 = pneg %p74
        %p573 = pneg %p98
        %p574 = pneg %p95
        %p575 = pneg %p119
        %p576 = pneg %p116
        %p577 = pneg %p140
        %p578 = pneg %p137
        %p579 = pneg %p161
        %p580 = pneg %p158
        %p581 = pneg %p182
        %p582 = pneg %p179
        %p583 = pneg %p203
        %p584 = pneg %p200
        %p585 = pneg %p224
        %p586 = pneg %p221
        %p587 = pneg %p245
        %p588 = pneg %p242
        %p589 = pneg %p266
        %p590 = pneg %p263
        %p591 = pneg %p287
        %p592 = pneg %p284
        %p593 = pneg %p308
        %p594 = pneg %p305
        %p595 = pneg %p329
        %p596 = pneg %p326
        %p597 = pneg %p355
        %p598 = pneg %p352
        %s599 = sand.u32 %s342, 1
        %s600 = scalar_lea.sflag [#allocation5], %s599
        %s601 = sand.u32 %s342, 1
        %s602 = smul.addr %s601, 64
        %s603 = scalar_lea.vmem [#allocation18], %s602
        %v605 = vld [vmem:[%s518] sm:$0xff]
        %v606 = vld [vmem:[%s518 + $0x8] sm:$0xff]
        %v607 = vld [vmem:[%s518 + $0x10] sm:$0xff]
        %v608 = vld [vmem:[%s518 + $0x18] sm:$0xff]
        %v609 = vld [vmem:[%s518 + $0x20] sm:$0xff]
        %v610 = vld [vmem:[%s518 + $0x28] sm:$0xff]
        %v611 = vld [vmem:[%s518 + $0x30] sm:$0xff]
        %v612 = vld [vmem:[%s518 + $0x38] sm:$0xff]
        %v613 = vpack.c.bf16 %v606, %v605
        %v614 = vpack.c.bf16 %v608, %v607
        %v615 = vpack.c.bf16 %v610, %v609
        %v616 = vpack.c.bf16 %v612, %v611
        %v617 = vld [vmem:[#allocation6] sm:$0xf]
        %vm618 = vcmask 64512
        %v620 = vsel %vm618, %v613, 0
        %v623 = vsel %vm618, %v614, 0
        %v626 = vsel %vm618, %v615, 0
        %v629 = vsel %vm618, %v616, 0
        %vm631 = vcmask 1043456
        %v633 = vsel %vm631, %v617, 0
        %635 = vmatpush.bf16.msra.mxu0 0
        %636 = vmatpush.bf16.msra.mxu0 0
        %637 = vmatpush.bf16.msra.mxu0 0
        %638 = vmatpush.bf16.msra.mxu0 0
        %639 = vmatpush.bf16.msra.mxu0 0
        %640 = vmatpush.bf16.msra.mxu0 0
        %641 = vmatpush.bf16.msra.mxu0 0
        %642 = vmatpush.bf16.msra.mxu0 %v633
        %643 = vmatmul.bf16.gmra.mxu0 %v620
        %v644 = vpop.f32.mrf.mxu0
        %v645 = vadd.f32 0.0, %v644
        %v646 = vpop.f32.mrf.mxu0
        %v647 = vadd.f32 0.0, %v646
        %648 = vmatmul.bf16.gmra.mxu0 %v623
        %v649 = vpop.f32.mrf.mxu0
        %v650 = vadd.f32 0.0, %v649
        %v651 = vpop.f32.mrf.mxu0
        %v652 = vadd.f32 0.0, %v651
        %653 = vmatmul.bf16.gmra.mxu0 %v626
        %v654 = vpop.f32.mrf.mxu0
        %v655 = vadd.f32 0.0, %v654
        %v656 = vpop.f32.mrf.mxu0
        %v657 = vadd.f32 0.0, %v656
        %658 = vmatmul.bf16.gmra.mxu0 %v629
        %v659 = vpop.f32.mrf.mxu0
        %v660 = vadd.f32 0.0, %v659
        %v661 = vpop.f32.mrf.mxu0
        %v662 = vadd.f32 0.0, %v661
        %663 = vdwg.mxu0
        %v664 = vld [vmem:[#allocation8] sm:$0x1]
        %v666 = vperm.slane %v664, 0
        %v668 = vmul.f32 %v645, %v666
        %v669 = vmul.f32 %v647, %v666
        %v670 = vmul.f32 %v650, %v666
        %v671 = vmul.f32 %v652, %v666
        %v672 = vmul.f32 %v655, %v666
        %v673 = vmul.f32 %v657, %v666
        %v674 = vmul.f32 %v660, %v666
        %v675 = vmul.f32 %v662, %v666
        %v676 = vld [vmem:[#allocation9] sm:$0x1]
        %v678 = vperm.slane %v676, 0
        %v680 = vadd.f32 %v668, %v678
        %v681 = vadd.f32 %v669, %v678
        %v682 = vadd.f32 %v670, %v678
        %v683 = vadd.f32 %v671, %v678
        %v684 = vadd.f32 %v672, %v678
        %v685 = vadd.f32 %v673, %v678
        %v686 = vadd.f32 %v674, %v678
        %v687 = vadd.f32 %v675, %v678
        %v688 = vadd.f32 %v680, 3.0
        %v689 = vadd.f32 %v681, 3.0
        %v690 = vadd.f32 %v682, 3.0
        %v691 = vadd.f32 %v683, 3.0
        %v692 = vadd.f32 %v684, 3.0
        %v693 = vadd.f32 %v685, 3.0
        %v694 = vadd.f32 %v686, 3.0
        %v695 = vadd.f32 %v687, 3.0
        %v696 = vmax.f32 %v688, 0.0
        %v697 = vmax.f32 %v689, 0.0
        %v698 = vmax.f32 %v690, 0.0
        %v699 = vmax.f32 %v691, 0.0
        %v700 = vmax.f32 %v692, 0.0
        %v701 = vmax.f32 %v693, 0.0
        %v702 = vmax.f32 %v694, 0.0
        %v703 = vmax.f32 %v695, 0.0
        %v704 = vmin.f32 %v696, 6.0
        %v705 = vmin.f32 %v697, 6.0
        %v706 = vmin.f32 %v698, 6.0
        %v707 = vmin.f32 %v699, 6.0
        %v708 = vmin.f32 %v700, 6.0
        %v709 = vmin.f32 %v701, 6.0
        %v710 = vmin.f32 %v702, 6.0
        %v711 = vmin.f32 %v703, 6.0
        %v712 = vmul.f32 %v680, %v704
        %v713 = vmul.f32 %v681, %v705
        %v714 = vmul.f32 %v682, %v706
        %v715 = vmul.f32 %v683, %v707
        %v716 = vmul.f32 %v684, %v708
        %v717 = vmul.f32 %v685, %v709
        %v718 = vmul.f32 %v686, %v710
        %v719 = vmul.f32 %v687, %v711
        %v720 = vld [vmem:[%s4] sm:$0x7]
        %v721 = vld [vmem:[%s4 + $0x4] sm:$0x7]
        %v722 = vld [vmem:[%s4 + $0x8] sm:$0x7]
        %vm723 = vcmask 130048
        %724 = vst.msk [vmem:[#allocation2] sm:$0xff] %vm723, 0.0
        %s725 = scalar_lea.vmem [#allocation2], 72
        %726 = vst.msk [vmem:[%s725] sm:$0xff] %vm723, 0.0
        %s727 = scalar_lea.vmem [#allocation2], 8
        %728 = vst.msk [vmem:[%s727] sm:$0xff] %vm723, %v712
        %729 = vst.msk [vmem:[%s727 + $0x8] sm:$0xff] %vm723, %v713
        %730 = vst.msk [vmem:[%s727 + $0x10] sm:$0xff] %vm723, %v714
        %731 = vst.msk [vmem:[%s727 + $0x18] sm:$0xff] %vm723, %v715
        %732 = vst.msk [vmem:[%s727 + $0x20] sm:$0xff] %vm723, %v716
        %733 = vst.msk [vmem:[%s727 + $0x28] sm:$0xff] %vm723, %v717
        %734 = vst.msk [vmem:[%s727 + $0x30] sm:$0xff] %vm723, %v718
        %735 = vst.msk [vmem:[%s727 + $0x38] sm:$0xff] %vm723, %v719
        %v736 = vld [vmem:[#allocation2] sm:$0xff]
        %v737 = vld [vmem:[#allocation2 + $0x8] sm:$0xff]
        %v738 = vld [vmem:[#allocation2 + $0x10] sm:$0xff]
        %v739 = vld [vmem:[#allocation2 + $0x18] sm:$0xff]
        %v740 = vld [vmem:[#allocation2 + $0x20] sm:$0xff]
        %v741 = vld [vmem:[#allocation2 + $0x28] sm:$0xff]
        %v742 = vld [vmem:[#allocation2 + $0x30] sm:$0xff]
        %v743 = vld [vmem:[#allocation2 + $0x38] sm:$0xff]
        %v744 = vld [vmem:[#allocation2 + $0x40] sm:$0xff]
        %v745 = vld [vmem:[#allocation2 + $0x48] sm:$0xff]
        %v746 = vlaneseq
        %v747 = vshrl.u32 %v746, 7
        %v748 = vrot.slane %v736, 7
        %v749 = vrot.slane %v737, 7
        %v750 = vrot.slane %v738, 7
        %v751 = vrot.slane %v739, 7
        %v752 = vrot.slane %v740, 7
        %v753 = vrot.slane %v741, 7
        %v754 = vrot.slane %v742, 7
        %v755 = vrot.slane %v743, 7
        %v756 = vrot.slane %v744, 7
        %v757 = vrot.slane %v745, 7
        %vm758 = vcmp.ge.s32.totalorder %v747, 1
        %vm759 = vcmp.lt.s32.totalorder %v747, 8
        %vm760 = vmand %vm758, %vm759
        %v761 = vsel %vm760, 1, 0
        %vm762 = vcmp.eq.s32.totalorder %v761, 1
        %v763 = vsel %vm762, %v748, 0.0
        %v764 = vsel %vm762, %v749, 0.0
        %v765 = vsel %vm762, %v750, 0.0
        %v766 = vsel %vm762, %v751, 0.0
        %v767 = vsel %vm762, %v752, 0.0
        %v768 = vsel %vm762, %v753, 0.0
        %v769 = vsel %vm762, %v754, 0.0
        %v770 = vsel %vm762, %v755, 0.0
        %v771 = vsel %vm762, %v756, 0.0
        %v772 = vsel %vm762, %v757, 0.0
        %v773 = vperm.slane %v720, 0
        %v774 = vmul.f32 %v763, %v773
        %v775 = vmul.f32 %v764, %v773
        %v776 = vmul.f32 %v765, %v773
        %v777 = vmul.f32 %v766, %v773
        %v778 = vmul.f32 %v767, %v773
        %v779 = vmul.f32 %v768, %v773
        %v780 = vmul.f32 %v769, %v773
        %v781 = vmul.f32 %v770, %v773
        %v782 = vperm.slane %v721, 0
        %v783 = vmul.f32 %v764, %v782
        %v784 = vmul.f32 %v765, %v782
        %v785 = vmul.f32 %v766, %v782
        %v786 = vmul.f32 %v767, %v782
        %v787 = vmul.f32 %v768, %v782
        %v788 = vmul.f32 %v769, %v782
        %v789 = vmul.f32 %v770, %v782
        %v790 = vmul.f32 %v771, %v782
        %v791 = vadd.f32 %v774, %v783
        %v792 = vadd.f32 %v775, %v784
        %v793 = vadd.f32 %v776, %v785
        %v794 = vadd.f32 %v777, %v786
        %v795 = vadd.f32 %v778, %v787
        %v796 = vadd.f32 %v779, %v788
        %v797 = vadd.f32 %v780, %v789
        %v798 = vadd.f32 %v781, %v790
        %v799 = vperm.slane %v722, 0
        %v800 = vmul.f32 %v765, %v799
        %v801 = vmul.f32 %v766, %v799
        %v802 = vmul.f32 %v767, %v799
        %v803 = vmul.f32 %v768, %v799
        %v804 = vmul.f32 %v769, %v799
        %v805 = vmul.f32 %v770, %v799
        %v806 = vmul.f32 %v771, %v799
        %v807 = vmul.f32 %v772, %v799
        %v808 = vadd.f32 %v791, %v800
        %v809 = vadd.f32 %v792, %v801
        %v810 = vadd.f32 %v793, %v802
        %v811 = vadd.f32 %v794, %v803
        %v812 = vadd.f32 %v795, %v804
        %v813 = vadd.f32 %v796, %v805
        %v814 = vadd.f32 %v797, %v806
        %v815 = vadd.f32 %v798, %v807
        %v816 = vperm.slane %v720, 1
        %v817 = vmul.f32 %v736, %v816
        %v818 = vmul.f32 %v737, %v816
        %v819 = vmul.f32 %v738, %v816
        %v820 = vmul.f32 %v739, %v816
        %v821 = vmul.f32 %v740, %v816
        %v822 = vmul.f32 %v741, %v816
        %v823 = vmul.f32 %v742, %v816
        %v824 = vmul.f32 %v743, %v816
        %v825 = vadd.f32 %v808, %v817
        %v826 = vadd.f32 %v809, %v818
        %v827 = vadd.f32 %v810, %v819
        %v828 = vadd.f32 %v811, %v820
        %v829 = vadd.f32 %v812, %v821
        %v830 = vadd.f32 %v813, %v822
        %v831 = vadd.f32 %v814, %v823
        %v832 = vadd.f32 %v815, %v824
        %v833 = vperm.slane %v721, 1
        %v834 = vmul.f32 %v737, %v833
        %v835 = vmul.f32 %v738, %v833
        %v836 = vmul.f32 %v739, %v833
        %v837 = vmul.f32 %v740, %v833
        %v838 = vmul.f32 %v741, %v833
        %v839 = vmul.f32 %v742, %v833
        %v840 = vmul.f32 %v743, %v833
        %v841 = vmul.f32 %v744, %v833
        %v842 = vadd.f32 %v825, %v834
        %v843 = vadd.f32 %v826, %v835
        %v844 = vadd.f32 %v827, %v836
        %v845 = vadd.f32 %v828, %v837
        %v846 = vadd.f32 %v829, %v838
        %v847 = vadd.f32 %v830, %v839
        %v848 = vadd.f32 %v831, %v840
        %v849 = vadd.f32 %v832, %v841
        %v850 = vperm.slane %v722, 1
        %v851 = vmul.f32 %v738, %v850
        %v852 = vmul.f32 %v739, %v850
        %v853 = vmul.f32 %v740, %v850
        %v854 = vmul.f32 %v741, %v850
        %v855 = vmul.f32 %v742, %v850
        %v856 = vmul.f32 %v743, %v850
        %v857 = vmul.f32 %v744, %v850
        %v858 = vmul.f32 %v745, %v850
        %v859 = vadd.f32 %v842, %v851
        %v860 = vadd.f32 %v843, %v852
        %v861 = vadd.f32 %v844, %v853
        %v862 = vadd.f32 %v845, %v854
        %v863 = vadd.f32 %v846, %v855
        %v864 = vadd.f32 %v847, %v856
        %v865 = vadd.f32 %v848, %v857
        %v866 = vadd.f32 %v849, %v858
        %v867 = vrot.slane %v736, 1
        %v868 = vrot.slane %v737, 1
        %v869 = vrot.slane %v738, 1
        %v870 = vrot.slane %v739, 1
        %v871 = vrot.slane %v740, 1
        %v872 = vrot.slane %v741, 1
        %v873 = vrot.slane %v742, 1
        %v874 = vrot.slane %v743, 1
        %v875 = vrot.slane %v744, 1
        %v876 = vrot.slane %v745, 1
        %vm877 = vcmp.ge.s32.totalorder %v747, 0
        %vm878 = vcmp.lt.s32.totalorder %v747, 7
        %vm879 = vmand %vm877, %vm878
        %v880 = vsel %vm879, 1, 0
        %vm881 = vcmp.eq.s32.totalorder %v880, 1
        %v882 = vsel %vm881, %v867, 0.0
        %v883 = vsel %vm881, %v868, 0.0
        %v884 = vsel %vm881, %v869, 0.0
        %v885 = vsel %vm881, %v870, 0.0
        %v886 = vsel %vm881, %v871, 0.0
        %v887 = vsel %vm881, %v872, 0.0
        %v888 = vsel %vm881, %v873, 0.0
        %v889 = vsel %vm881, %v874, 0.0
        %v890 = vsel %vm881, %v875, 0.0
        %v891 = vsel %vm881, %v876, 0.0
        %v892 = vperm.slane %v720, 2
        %v893 = vmul.f32 %v882, %v892
        %v894 = vmul.f32 %v883, %v892
        %v895 = vmul.f32 %v884, %v892
        %v896 = vmul.f32 %v885, %v892
        %v897 = vmul.f32 %v886, %v892
        %v898 = vmul.f32 %v887, %v892
        %v899 = vmul.f32 %v888, %v892
        %v900 = vmul.f32 %v889, %v892
        %v901 = vadd.f32 %v859, %v893
        %v902 = vadd.f32 %v860, %v894
        %v903 = vadd.f32 %v861, %v895
        %v904 = vadd.f32 %v862, %v896
        %v905 = vadd.f32 %v863, %v897
        %v906 = vadd.f32 %v864, %v898
        %v907 = vadd.f32 %v865, %v899
        %v908 = vadd.f32 %v866, %v900
        %v909 = vperm.slane %v721, 2
        %v910 = vmul.f32 %v883, %v909
        %v911 = vmul.f32 %v884, %v909
        %v912 = vmul.f32 %v885, %v909
        %v913 = vmul.f32 %v886, %v909
        %v914 = vmul.f32 %v887, %v909
        %v915 = vmul.f32 %v888, %v909
        %v916 = vmul.f32 %v889, %v909
        %v917 = vmul.f32 %v890, %v909
        %v918 = vadd.f32 %v901, %v910
        %v919 = vadd.f32 %v902, %v911
        %v920 = vadd.f32 %v903, %v912
        %v921 = vadd.f32 %v904, %v913
        %v922 = vadd.f32 %v905, %v914
        %v923 = vadd.f32 %v906, %v915
        %v924 = vadd.f32 %v907, %v916
        %v925 = vadd.f32 %v908, %v917
        %v926 = vperm.slane %v722, 2
        %v927 = vmul.f32 %v884, %v926
        %v928 = vmul.f32 %v885, %v926
        %v929 = vmul.f32 %v886, %v926
        %v930 = vmul.f32 %v887, %v926
        %v931 = vmul.f32 %v888, %v926
        %v932 = vmul.f32 %v889, %v926
        %v933 = vmul.f32 %v890, %v926
        %v934 = vmul.f32 %v891, %v926
        %v935 = vadd.f32 %v918, %v927
        %v936 = vadd.f32 %v919, %v928
        %v937 = vadd.f32 %v920, %v929
        %v938 = vadd.f32 %v921, %v930
        %v939 = vadd.f32 %v922, %v931
        %v940 = vadd.f32 %v923, %v932
        %v941 = vadd.f32 %v924, %v933
        %v942 = vadd.f32 %v925, %v934
        %v943 = vld [vmem:[#allocation11] sm:$0x1]
        %v945 = vperm.slane %v943, 0
        %v947 = vmul.f32 %v935, %v945
        %v948 = vmul.f32 %v936, %v945
        %v949 = vmul.f32 %v937, %v945
        %v950 = vmul.f32 %v938, %v945
        %v951 = vmul.f32 %v939, %v945
        %v952 = vmul.f32 %v940, %v945
        %v953 = vmul.f32 %v941, %v945
        %v954 = vmul.f32 %v942, %v945
        %v955 = vld [vmem:[#allocation12] sm:$0x1]
        %v957 = vperm.slane %v955, 0
        %v959 = vadd.f32 %v947, %v957
        %v960 = vadd.f32 %v948, %v957
        %v961 = vadd.f32 %v949, %v957
        %v962 = vadd.f32 %v950, %v957
        %v963 = vadd.f32 %v951, %v957
        %v964 = vadd.f32 %v952, %v957
        %v965 = vadd.f32 %v953, %v957
        %v966 = vadd.f32 %v954, %v957
        %v967 = vadd.f32 %v959, 3.0
        %v968 = vadd.f32 %v960, 3.0
        %v969 = vadd.f32 %v961, 3.0
        %v970 = vadd.f32 %v962, 3.0
        %v971 = vadd.f32 %v963, 3.0
        %v972 = vadd.f32 %v964, 3.0
        %v973 = vadd.f32 %v965, 3.0
        %v974 = vadd.f32 %v966, 3.0
        %v975 = vmax.f32 %v967, 0.0
        %v976 = vmax.f32 %v968, 0.0
        %v977 = vmax.f32 %v969, 0.0
        %v978 = vmax.f32 %v970, 0.0
        %v979 = vmax.f32 %v971, 0.0
        %v980 = vmax.f32 %v972, 0.0
        %v981 = vmax.f32 %v973, 0.0
        %v982 = vmax.f32 %v974, 0.0
        %v983 = vmin.f32 %v975, 6.0
        %v984 = vmin.f32 %v976, 6.0
        %v985 = vmin.f32 %v977, 6.0
        %v986 = vmin.f32 %v978, 6.0
        %v987 = vmin.f32 %v979, 6.0
        %v988 = vmin.f32 %v980, 6.0
        %v989 = vmin.f32 %v981, 6.0
        %v990 = vmin.f32 %v982, 6.0
        %v991 = vmul.f32 %v959, %v983
        %v992 = vmul.f32 %v960, %v984
        %v993 = vmul.f32 %v961, %v985
        %v994 = vmul.f32 %v962, %v986
        %v995 = vmul.f32 %v963, %v987
        %v996 = vmul.f32 %v964, %v988
        %v997 = vmul.f32 %v965, %v989
        %v998 = vmul.f32 %v966, %v990
        %v999 = vsel %vm723, %v991, 0.0
        %v1000 = vsel %vm723, %v992, 0.0
        %v1001 = vadd.f32 %v999, %v1000
        %v1002 = vsel %vm723, %v993, 0.0
        %v1003 = vadd.f32 %v1001, %v1002
        %v1004 = vsel %vm723, %v994, 0.0
        %v1005 = vadd.f32 %v1003, %v1004
        %v1006 = vsel %vm723, %v995, 0.0
        %v1007 = vadd.f32 %v1005, %v1006
        %v1008 = vsel %vm723, %v996, 0.0
        %v1009 = vadd.f32 %v1007, %v1008
        %v1010 = vsel %vm723, %v997, 0.0
        %v1011 = vadd.f32 %v1009, %v1010
        %v1012 = vsel %vm723, %v998, 0.0
        %v1013 = vadd.f32 %v1011, %v1012
        %v1014 = vrot.slane %v1013, 4
        %v1015 = vadd.f32 %v1013, %v1014
        %v1016 = vrot.slane %v1015, 2
        %v1017 = vadd.f32 %v1015, %v1016
        %v1018 = vrot.slane %v1017, 1
        %v1019 = vadd.f32 %v1017, %v1018
        %v1020 = vmul.f32 %v1019, 0.015625
        %v1021 = vpack.c.bf16 %v1020, %v1020
        %v1022 = vld [vmem:[%s7] sm:$0xf]
        %v1023 = vld [vmem:[%s7 + $0x4] sm:$0xf]
        %v1024 = vld [vmem:[#allocation14] sm:$0x1]
        %v1027 = vunpack.c.l.b16 %v1022
        %v1028 = vunpack.c.l.b16 %v1023
        %v1029 = vpack.c.b16 %v1028, %v1027
        %v1032 = vsel %vm723, %v1021, 0
        %1034 = vmatpush.bf16.msra.mxu0 0
        %1035 = vmatpush.bf16.msra.mxu0 0
        %1036 = vmatpush.bf16.msra.mxu0 0
        %1037 = vmatpush.bf16.msra.mxu0 0
        %1038 = vmatpush.bf16.msra.mxu0 0
        %1039 = vmatpush.bf16.msra.mxu0 0
        %1040 = vmatpush.bf16.msra.mxu0 0
        %1041 = vmatpush.bf16.msra.mxu0 %v1029
        %1042 = vmatmul.bf16.gmra.mxu0 %v1032
        %v1043 = vpop.f32.mrf.mxu0
        %v1044 = vadd.f32 %v1024, %v1043
        %v1045 = vpop.f32.mrf.mxu0
        %1046 = vdwg.mxu0
        %v1047 = vmax.f32 %v1044, 0.0
        %v1048 = vpack.c.bf16 %v1047, %v1047
        %v1049 = vld [vmem:[#allocation15] sm:$0x3]
        %v1050 = vld [vmem:[#allocation17] sm:$0x1]
        %vm1051 = vcmask 31744
        %v1053 = vsel %vm1051, %v1048, 0
        %vm1055 = vcmask 1041408
        %v1057 = vsel %vm1055, %v1049, 0
        %1059 = vmatpush.bf16.msra.mxu0 0
        %1060 = vmatpush.bf16.msra.mxu0 0
        %1061 = vmatpush.bf16.msra.mxu0 0
        %1062 = vmatpush.bf16.msra.mxu0 0
        %1063 = vmatpush.bf16.msra.mxu0 0
        %1064 = vmatpush.bf16.msra.mxu0 0
        %1065 = vmatpush.bf16.msra.mxu0 0
        %1066 = vmatpush.bf16.msra.mxu0 %v1057
        %1067 = vmatmul.bf16.gmra.mxu0 %v1053
        %v1068 = vpop.f32.mrf.mxu0
        %v1069 = vadd.f32 %v1050, %v1068
        %v1070 = vpop.f32.mrf.mxu0
        %1071 = vdwg.mxu0
        %v1072 = vadd.f32 %v1069, 3.0
        %v1073 = vmax.f32 %v1072, 0.0
        %v1074 = vmin.f32 %v1073, 6.0
        %v1075 = vmul.f32 %v1074, 0.16666667
        %v1076 = vperm.slane %v1075, 0
        %v1077 = vmul.f32 %v991, %v1076
        %v1078 = vmul.f32 %v992, %v1076
        %v1079 = vmul.f32 %v993, %v1076
        %v1080 = vmul.f32 %v994, %v1076
        %v1081 = vmul.f32 %v995, %v1076
        %v1082 = vmul.f32 %v996, %v1076
        %v1083 = vmul.f32 %v997, %v1076
        %v1084 = vmul.f32 %v998, %v1076
        %v1085 = vpack.c.bf16 %v1078, %v1077
        %v1086 = vpack.c.bf16 %v1080, %v1079
        %v1087 = vpack.c.bf16 %v1082, %v1081
        %v1088 = vpack.c.bf16 %v1084, %v1083
        %v1089 = vld [vmem:[%s11] sm:$0xf]
        %v1090 = vld [vmem:[%s11 + $0x4] sm:$0xf]
        %v1093 = vunpack.c.l.b16 %v1089
        %v1094 = vunpack.c.l.b16 %v1090
        %v1095 = vpack.c.b16 %v1094, %v1093
        %v1098 = vsel %vm723, %v1085, 0
        %v1101 = vsel %vm723, %v1086, 0
        %v1104 = vsel %vm723, %v1087, 0
        %v1107 = vsel %vm723, %v1088, 0
        %1109 = vmatpush.bf16.msra.mxu0 0
        %1110 = vmatpush.bf16.msra.mxu0 0
        %1111 = vmatpush.bf16.msra.mxu0 0
        %1112 = vmatpush.bf16.msra.mxu0 0
        %1113 = vmatpush.bf16.msra.mxu0 0
        %1114 = vmatpush.bf16.msra.mxu0 0
        %1115 = vmatpush.bf16.msra.mxu0 0
        %1116 = vmatpush.bf16.msra.mxu0 %v1095
        %1117 = vmatmul.bf16.gmra.mxu0 %v1098
        %v1118 = vpop.f32.mrf.mxu0
        %v1119 = vadd.f32 0.0, %v1118
        %v1120 = vpop.f32.mrf.mxu0
        %v1121 = vadd.f32 0.0, %v1120
        %1122 = vmatmul.bf16.gmra.mxu0 %v1101
        %v1123 = vpop.f32.mrf.mxu0
        %v1124 = vadd.f32 0.0, %v1123
        %v1125 = vpop.f32.mrf.mxu0
        %v1126 = vadd.f32 0.0, %v1125
        %1127 = vmatmul.bf16.gmra.mxu0 %v1104
        %v1128 = vpop.f32.mrf.mxu0
        %v1129 = vadd.f32 0.0, %v1128
        %v1130 = vpop.f32.mrf.mxu0
        %v1131 = vadd.f32 0.0, %v1130
        %1132 = vmatmul.bf16.gmra.mxu0 %v1107
        %v1133 = vpop.f32.mrf.mxu0
        %v1134 = vadd.f32 0.0, %v1133
        %v1135 = vpop.f32.mrf.mxu0
        %v1136 = vadd.f32 0.0, %v1135
        %1137 = vdwg.mxu0
        %v1138 = vld [vmem:[%s12] sm:$0x1]
        %v1140 = vperm.slane %v1138, 0
        %v1142 = vmul.f32 %v1119, %v1140
        %v1143 = vmul.f32 %v1121, %v1140
        %v1144 = vmul.f32 %v1124, %v1140
        %v1145 = vmul.f32 %v1126, %v1140
        %v1146 = vmul.f32 %v1129, %v1140
        %v1147 = vmul.f32 %v1131, %v1140
        %v1148 = vmul.f32 %v1134, %v1140
        %v1149 = vmul.f32 %v1136, %v1140
        %v1150 = vld [vmem:[%s13] sm:$0x1]
        %v1152 = vperm.slane %v1150, 0
        %v1154 = vadd.f32 %v1142, %v1152
        %v1155 = vadd.f32 %v1143, %v1152
        %v1156 = vadd.f32 %v1144, %v1152
        %v1157 = vadd.f32 %v1145, %v1152
        %v1158 = vadd.f32 %v1146, %v1152
        %v1159 = vadd.f32 %v1147, %v1152
        %v1160 = vadd.f32 %v1148, %v1152
        %v1161 = vadd.f32 %v1149, %v1152
        %1162 = vst [vmem:[%s603] sm:$0xff] %v1154
        %1163 = vst [vmem:[%s603 + $0x8] sm:$0xff] %v1155
        %1164 = vst [vmem:[%s603 + $0x10] sm:$0xff] %v1156
        %1165 = vst [vmem:[%s603 + $0x18] sm:$0xff] %v1157
        %1166 = vst [vmem:[%s603 + $0x20] sm:$0xff] %v1158
        %1167 = vst [vmem:[%s603 + $0x28] sm:$0xff] %v1159
        %1168 = vst [vmem:[%s603 + $0x30] sm:$0xff] %v1160
        %1169 = vst [vmem:[%s603 + $0x38] sm:$0xff] %v1161
        %s1170 = sand.u32 %s342, 1
        %s1171 = scalar_lea.sflag [#allocation5], %s1170
        %s1172 = sand.u32 %s342, 1
        %s1173 = smul.addr %s1172, 64
        %s1174 = scalar_lea.vmem [#allocation18], %s1173
        // Predicated region
        $region113: #{tpu_custom_call.1} parent=75 // pred_check
          %p1175 = pneg %p352
        $region114: #{tpu_custom_call.1} parent=75 // pred_check_branch
          %1177 = sbr.rel (%p1175) target = $region116
        $region115: #{tpu_custom_call.1} parent=75 // pred_region
          %1179 = vsyncadd %s1171, 0
          %s1180 = smul.addr %s35, 8
          %s1181 = smul.addr %s1180, 8
          %s1182 = scalar_lea.hbm %s14, %s1181
          %s1183 = sshll.u32 %s1174, 4
          %s1184 = int_to_ptr.vmem [resolvable:$true] %s1183
          %s1185 = sshll.u32 %s1182, 4
          %s1186 = int_to_ptr.hbm [resolvable:$true] %s1185
          %1191 = dma.vmem_to_hbm [thread:$0]  %s1184, 1024, %s1186, %s1171, 128, 128, 8
        $region116: #{tpu_custom_call.1} parent=75 // pred_fallthru
          _
      $region76: #{tpu_custom_call.1} parent=5 // pred_fallthru
        _
      %p1192 = scmp.le.s32.totalorder 2, %s30
      // Predicated region
      $region117: #{tpu_custom_call.1} parent=5 // pred_check
        %p1193 = pneg %p1192
      $region118: #{tpu_custom_call.1} parent=5 // pred_check_branch
        %1195 = sbr.rel (%p1193) target = $region120
      $region119: #{tpu_custom_call.1} parent=5 // pred_region
        %s1196 = ssub.s32 %s30, 2
        // Predicated region
        $region121: #{tpu_custom_call.1} parent=119 // pred_check
          %p1197 = pneg %p358
        $region122: #{tpu_custom_call.1} parent=119 // pred_check_branch
          %1199 = sbr.rel (%p1197) target = $region124
        $region123: #{tpu_custom_call.1} parent=119 // pred_region
          %s1200 = sand.u32 %s343, 1
          %s1201 = scalar_lea.sflag [#allocation5], %s1200
          %s1202 = sand.u32 %s343, 1
          %s1203 = smul.addr %s1202, 64
          %s1204 = scalar_lea.vmem [#allocation18], %s1203
          %1206 = dma.done %s1201, 1024
        $region124: #{tpu_custom_call.1} parent=119 // pred_fallthru
          _
      $region120: #{tpu_custom_call.1} parent=5 // pred_fallthru
        _
    $region6: #{tpu_custom_call.1} parent=1 // loop_footer
      %s34 = sadd.s32 1, %s30
    $region7: #{tpu_custom_call.1} parent=1 // loop_footer_branch
      %29 = sbr.rel target = $region3
    $region8: #{tpu_custom_call.1} parent=1 // loop_exit
      _
    %1207 = vsyncpa [#allocation4], 1
    %s1208 = scalar_lea.sflag [#allocation4], 1
    %1209 = vsyncpa %s1208, 1
    %1210 = vsyncpa [#allocation7], 1
    %1211 = vsyncpa [#allocation10], 1
    %1212 = vsyncpa [#allocation13], 1
    %1213 = vsyncpa [#allocation16], 1
    %1214 = vsyncpa [#allocation5], 1
    %s1215 = scalar_lea.sflag [#allocation5], 1
    %1216 = vsyncpa %s1215, 1

</llo_original>
